<compile_context>
chip_gen: v6e
topology: v6e:2x2x1
jax: 0.10.0
libtpu: 0.0.40
codegen_flags: <defaults>
</compile_context>

<pallas_src>
import functools

import jax
import jax.numpy as jnp
import numpy as np
from jax.experimental import pallas as pl
from jax.experimental.pallas import tpu as pltpu


def _attn_rel_scl_kernel(x_ref, wqkv_ref, bias_ref, g_ref, b_ref, o_ref, *,
                         num_heads, scale, eps):
    _, S, E = x_ref.shape
    H = num_heads
    Dh = E // H

    x = x_ref[0].astype(jnp.bfloat16)            # (S, E)   bf16 MXU inputs
    w = wqkv_ref[...]                            # (E, 3E)  already bf16

    # Fused QKV projection (one big MXU matmul, f32 accumulation).
    qkv = jnp.dot(x, w, preferred_element_type=jnp.float32)        # (S, 3E) f32

    q = qkv[:, 0:E] * scale                      # fold softmax scale into q
    k = qkv[:, E:2 * E]
    v = qkv[:, 2 * E:3 * E]

    # Per-head attention on (S, Dh) lane views of the fused projection.
    heads = []
    for h in range(H):                           # static unroll, H is small
        lo, hi = h * Dh, (h + 1) * Dh
        qh = q[:, lo:hi].astype(jnp.bfloat16)
        kh = k[:, lo:hi].astype(jnp.bfloat16)
        vh = v[:, lo:hi].astype(jnp.bfloat16)

        # scores[i, j] = q_i . k_j   (no materialised k^T)
        s = jax.lax.dot_general(qh, kh, (((1,), (1,)), ((), ())),
                                preferred_element_type=jnp.float32)  # (S, S)
        s = s - jnp.max(s, axis=-1, keepdims=True)
        e = jnp.exp(s)
        denom = jnp.sum(e, axis=-1, keepdims=True)
        # EUP reciprocal (approx=True is available when a few-ulp softmax error
        # is acceptable; kept exact here to stay tight against the f32 reference).
        p = e * pl.reciprocal(denom, approx=False)

        # Relative position bias is added AFTER the softmax (as in PyTorch).
        p = p + bias_ref[h]

        heads.append(jnp.dot(p.astype(jnp.bfloat16), vh,
                             preferred_element_type=jnp.float32))    # (S, Dh)

    # Head merge == PyTorch out.transpose(1,2).reshape(B, S, E)
    out = jnp.concatenate(heads, axis=-1)        # (S, E) lane-dense

    # Fused LayerNorm over E (single-pass variance, EUP rsqrt).
    mean = jnp.mean(out, axis=-1, keepdims=True)
    msq = jnp.mean(out * out, axis=-1, keepdims=True)
    var = msq - mean * mean
    inv = jax.lax.rsqrt(var + eps)
    o_ref[0] = ((out - mean) * inv) * g_ref[...] + b_ref[...]


def attention_rel_scl(x, wq, wk, wv, rel_bias_table, gamma, beta, *, num_heads):
    B, S, E = x.shape
    H = num_heads
    assert E % H == 0
    scale = float(E) ** (-0.5)    # PyTorch uses emb_size**-0.5 (NOT head dim)

    # Fused, pre-transposed QKV weight: x @ w_qkv == [x@Wq.T | x@Wk.T | x@Wv.T].
    w_qkv = jnp.concatenate([wq.T, wk.T, wv.T], axis=1).astype(jnp.bfloat16)  # (E, 3E)

    # relative_bias[h, i, j] = table[i - j + (S-1), h]
    # (exactly what the PyTorch gather(relative_index) + rearrange produces).
    idx = jnp.arange(S)[:, None] - jnp.arange(S)[None, :] + (S - 1)           # (S, S)
    rel_bias = jnp.transpose(rel_bias_table[idx], (2, 0, 1)).astype(jnp.float32)  # (H,S,S)

    kernel = functools.partial(_attn_rel_scl_kernel,
                               num_heads=H, scale=scale, eps=1e-5)
    return pl.pallas_call(
        kernel,
        out_shape=jax.ShapeDtypeStruct((B, S, E), jnp.float32),
        grid=(B,),
        in_specs=[
            pl.BlockSpec((1, S, E), lambda b: (b, 0, 0)),     # x (per batch)
            pl.BlockSpec((E, 3 * E), lambda b: (0, 0)),       # fused Wqkv (constant -> DMA once)
            pl.BlockSpec((H, S, S), lambda b: (0, 0, 0)),     # relative bias (constant)
            pl.BlockSpec((1, E), lambda b: (0, 0)),           # LayerNorm gamma
            pl.BlockSpec((1, E), lambda b: (0, 0)),           # LayerNorm beta
        ],
        out_specs=pl.BlockSpec((1, S, E), lambda b: (b, 0, 0)),
        compiler_params=pltpu.CompilerParams(dimension_semantics=("parallel",)),
    )(x, w_qkv, rel_bias, gamma.reshape(1, E), beta.reshape(1, E))


def _reference(x, wq, wk, wv, table, gamma, beta, num_heads):
    """Pure-JAX (f32) transcription of the PyTorch forward, for verification."""
    B, S, E = x.shape
    H = num_heads
    Dh = E // H
    scale = float(E) ** (-0.5)
    q = (x @ wq.T).reshape(B, S, H, Dh).transpose(0, 2, 1, 3)   # (B,H,S,Dh)
    k = (x @ wk.T).reshape(B, S, H, Dh).transpose(0, 2, 3, 1)   # (B,H,Dh,S)
    v = (x @ wv.T).reshape(B, S, H, Dh).transpose(0, 2, 1, 3)   # (B,H,S,Dh)
    attn = jnp.matmul(q, k) * scale
    attn = jax.nn.softmax(attn, axis=-1)
    idx = jnp.arange(S)[:, None] - jnp.arange(S)[None, :] + (S - 1)
    rel = jnp.transpose(table[idx], (2, 0, 1))[None]            # (1,H,S,S)
    attn = attn + rel                                           # bias AFTER softmax
    out = jnp.matmul(attn, v).transpose(0, 2, 1, 3).reshape(B, S, E)
    mean = out.mean(-1, keepdims=True)
    var = ((out - mean) ** 2).mean(-1, keepdims=True)
    return (out - mean) / jnp.sqrt(var + 1e-5) * gamma + beta


if __name__ == "__main__":
    # The module's `.repeat(1, 8)` hard-codes 8 heads.
    B, S, E, H = 2, 8, 32, 8      # batch, seq_len, emb_size, num_heads (Dh = 4)

    key = jax.random.PRNGKey(0)
    kx, kq, kk, kv, kt, kg, kb = jax.random.split(key, 7)
    x = jax.random.normal(kx, (B, S, E), jnp.float32)
    wq = jax.random.normal(kq, (E, E), jnp.float32) * (E ** -0.5)
    wk = jax.random.normal(kk, (E, E), jnp.float32) * (E ** -0.5)
    wv = jax.random.normal(kv, (E, E), jnp.float32) * (E ** -0.5)
    # PyTorch initialises the table to zeros; use random values so the bias path
    # is actually exercised by the check.
    table = jax.random.normal(kt, (2 * S - 1, H), jnp.float32)
    gamma = 1.0 + 0.1 * jax.random.normal(kg, (E,), jnp.float32)
    beta = 0.1 * jax.random.normal(kb, (E,), jnp.float32)

    fn = jax.jit(functools.partial(attention_rel_scl, num_heads=H))
    out = jax.block_until_ready(fn(x, wq, wk, wv, table, gamma, beta))

    with jax.default_matmul_precision("highest"):
        ref = jax.block_until_ready(_reference(x, wq, wk, wv, table, gamma, beta, H))
    # Tolerance accounts for bf16 matmul inputs (f32 accumulation) vs the f32 ref.
    np.testing.assert_allclose(np.asarray(out), np.asarray(ref), rtol=2e-2, atol=2e-2)

    print("KERNEL_OK")
</pallas_src>

<mosaic_0001>
module attributes {stable_mosaic.version = 11 : i64} {
  func.func @_attn_rel_scl_kernel(%arg0: i32, %arg1: memref<1x8x32xf32, #tpu.memory_space<vmem>>, %arg2: memref<32x96xbf16, #tpu.memory_space<vmem>>, %arg3: memref<8x8x8xf32, #tpu.memory_space<vmem>>, %arg4: memref<1x32xf32, #tpu.memory_space<vmem>>, %arg5: memref<1x32xf32, #tpu.memory_space<vmem>>, %arg6: memref<1x8x32xf32, #tpu.memory_space<vmem>>) attributes {dimension_semantics = [#tpu.dimension_semantics<parallel>], iteration_bounds = array<i64: 2>, scalar_prefetch = 0 : i64, scratch_operands = 0 : i64, tpu.core_type = #tpu.core_type<tc>, window_params = [{transform_indices = @transform_0, window_bounds = array<i64: 1, 8, 32>}, {pipeline_mode = #tpu.pipeline_mode<synchronous>, transform_indices = @transform_1, window_bounds = array<i64: 32, 96>}, {pipeline_mode = #tpu.pipeline_mode<synchronous>, transform_indices = @transform_2, window_bounds = array<i64: 8, 8, 8>}, {pipeline_mode = #tpu.pipeline_mode<synchronous>, transform_indices = @transform_3, window_bounds = array<i64: 1, 32>}, {pipeline_mode = #tpu.pipeline_mode<synchronous>, transform_indices = @transform_4, window_bounds = array<i64: 1, 32>}, {transform_indices = @transform_5, window_bounds = array<i64: 1, 8, 32>}]} {
    %c0 = arith.constant 0 : index
    %c0_0 = arith.constant 0 : index
    %c0_1 = arith.constant 0 : index
    %0 = vector.load %arg1[%c0, %c0_0, %c0_1] : memref<1x8x32xf32, #tpu.memory_space<vmem>>, vector<1x8x32xf32>
    %1 = vector.shape_cast %0 : vector<1x8x32xf32> to vector<8x32xf32>
    %2 = arith.truncf %1 : vector<8x32xf32> to vector<8x32xbf16>
    %c0_2 = arith.constant 0 : index
    %c0_3 = arith.constant 0 : index
    %3 = vector.load %arg2[%c0_2, %c0_3] : memref<32x96xbf16, #tpu.memory_space<vmem>>, vector<32x96xbf16>
    %cst = arith.constant dense<0.000000e+00> : vector<8x96xf32>
    %4 = tpu.matmul %2, %3, %cst {dimension_numbers = #tpu.dot_dimension_numbers<[1], [0], [0], [1], [0, 0, 1, 1], [], []>} : vector<8x32xbf16>, vector<32x96xbf16>, vector<8x96xf32> -> vector<8x96xf32>
    %5 = vector.extract_strided_slice %4 {offsets = [0, 0], sizes = [8, 32], strides = [1, 1]} : vector<8x96xf32> to vector<8x32xf32>
    %cst_4 = arith.constant 0.176776692 : f32
    %6 = vector.broadcast %cst_4 : f32 to vector<8x32xf32>
    %7 = arith.mulf %5, %6 : vector<8x32xf32>
    %8 = vector.extract_strided_slice %4 {offsets = [0, 32], sizes = [8, 32], strides = [1, 1]} : vector<8x96xf32> to vector<8x32xf32>
    %9 = vector.extract_strided_slice %4 {offsets = [0, 64], sizes = [8, 32], strides = [1, 1]} : vector<8x96xf32> to vector<8x32xf32>
    %10 = vector.extract_strided_slice %7 {offsets = [0, 0], sizes = [8, 4], strides = [1, 1]} : vector<8x32xf32> to vector<8x4xf32>
    %11 = arith.truncf %10 : vector<8x4xf32> to vector<8x4xbf16>
    %12 = vector.extract_strided_slice %8 {offsets = [0, 0], sizes = [8, 4], strides = [1, 1]} : vector<8x32xf32> to vector<8x4xf32>
    %13 = arith.truncf %12 : vector<8x4xf32> to vector<8x4xbf16>
    %14 = vector.extract_strided_slice %9 {offsets = [0, 0], sizes = [8, 4], strides = [1, 1]} : vector<8x32xf32> to vector<8x4xf32>
    %15 = arith.truncf %14 : vector<8x4xf32> to vector<8x4xbf16>
    %cst_5 = arith.constant dense<0.000000e+00> : vector<8x8xf32>
    %16 = tpu.matmul %11, %13, %cst_5 {dimension_numbers = #tpu.dot_dimension_numbers<[1], [1], [0], [0], [0, 0, 1, 0], [], []>} : vector<8x4xbf16>, vector<8x4xbf16>, vector<8x8xf32> -> vector<8x8xf32>
    %cst_6 = arith.constant dense<0xFF800000> : vector<8xf32>
    %17 = vector.multi_reduction <maximumf>, %16, %cst_6 [1] : vector<8x8xf32> to vector<8xf32>
    %18 = vector.shape_cast %17 : vector<8xf32> to vector<8x1xf32>
    %19 = vector.broadcast %18 : vector<8x1xf32> to vector<8x8xf32>
    %20 = arith.subf %16, %19 : vector<8x8xf32>
    %21 = math.exp %20 : vector<8x8xf32>
    %cst_7 = arith.constant dense<0.000000e+00> : vector<8xf32>
    %22 = vector.multi_reduction <add>, %21, %cst_7 [1] : vector<8x8xf32> to vector<8xf32>
    %23 = vector.shape_cast %22 : vector<8xf32> to vector<8x1xf32>
    %24 = tpu.reciprocal %23 : vector<8x1xf32> -> vector<8x1xf32>
    %25 = vector.broadcast %24 : vector<8x1xf32> to vector<8x8xf32>
    %26 = arith.mulf %21, %25 : vector<8x8xf32>
    %c0_8 = arith.constant 0 : index
    %c0_9 = arith.constant 0 : index
    %c0_10 = arith.constant 0 : index
    %27 = vector.load %arg3[%c0_8, %c0_9, %c0_10] : memref<8x8x8xf32, #tpu.memory_space<vmem>>, vector<1x8x8xf32>
    %28 = vector.shape_cast %27 : vector<1x8x8xf32> to vector<8x8xf32>
    %29 = arith.addf %26, %28 : vector<8x8xf32>
    %30 = arith.truncf %29 : vector<8x8xf32> to vector<8x8xbf16>
    %cst_11 = arith.constant dense<0.000000e+00> : vector<8x4xf32>
    %31 = tpu.matmul %30, %15, %cst_11 {dimension_numbers = #tpu.dot_dimension_numbers<[1], [0], [0], [1], [0, 0, 1, 1], [], []>} : vector<8x8xbf16>, vector<8x4xbf16>, vector<8x4xf32> -> vector<8x4xf32>
    %32 = vector.extract_strided_slice %7 {offsets = [0, 4], sizes = [8, 4], strides = [1, 1]} : vector<8x32xf32> to vector<8x4xf32>
    %33 = arith.truncf %32 : vector<8x4xf32> to vector<8x4xbf16>
    %34 = vector.extract_strided_slice %8 {offsets = [0, 4], sizes = [8, 4], strides = [1, 1]} : vector<8x32xf32> to vector<8x4xf32>
    %35 = arith.truncf %34 : vector<8x4xf32> to vector<8x4xbf16>
    %36 = vector.extract_strided_slice %9 {offsets = [0, 4], sizes = [8, 4], strides = [1, 1]} : vector<8x32xf32> to vector<8x4xf32>
    %37 = arith.truncf %36 : vector<8x4xf32> to vector<8x4xbf16>
    %cst_12 = arith.constant dense<0.000000e+00> : vector<8x8xf32>
    %38 = tpu.matmul %33, %35, %cst_12 {dimension_numbers = #tpu.dot_dimension_numbers<[1], [1], [0], [0], [0, 0, 1, 0], [], []>} : vector<8x4xbf16>, vector<8x4xbf16>, vector<8x8xf32> -> vector<8x8xf32>
    %cst_13 = arith.constant dense<0xFF800000> : vector<8xf32>
    %39 = vector.multi_reduction <maximumf>, %38, %cst_13 [1] : vector<8x8xf32> to vector<8xf32>
    %40 = vector.shape_cast %39 : vector<8xf32> to vector<8x1xf32>
    %41 = vector.broadcast %40 : vector<8x1xf32> to vector<8x8xf32>
    %42 = arith.subf %38, %41 : vector<8x8xf32>
    %43 = math.exp %42 : vector<8x8xf32>
    %cst_14 = arith.constant dense<0.000000e+00> : vector<8xf32>
    %44 = vector.multi_reduction <add>, %43, %cst_14 [1] : vector<8x8xf32> to vector<8xf32>
    %45 = vector.shape_cast %44 : vector<8xf32> to vector<8x1xf32>
    %46 = tpu.reciprocal %45 : vector<8x1xf32> -> vector<8x1xf32>
    %47 = vector.broadcast %46 : vector<8x1xf32> to vector<8x8xf32>
    %48 = arith.mulf %43, %47 : vector<8x8xf32>
    %c1 = arith.constant 1 : index
    %c0_15 = arith.constant 0 : index
    %c0_16 = arith.constant 0 : index
    %49 = vector.load %arg3[%c1, %c0_15, %c0_16] : memref<8x8x8xf32, #tpu.memory_space<vmem>>, vector<1x8x8xf32>
    %50 = vector.shape_cast %49 : vector<1x8x8xf32> to vector<8x8xf32>
    %51 = arith.addf %48, %50 : vector<8x8xf32>
    %52 = arith.truncf %51 : vector<8x8xf32> to vector<8x8xbf16>
    %cst_17 = arith.constant dense<0.000000e+00> : vector<8x4xf32>
    %53 = tpu.matmul %52, %37, %cst_17 {dimension_numbers = #tpu.dot_dimension_numbers<[1], [0], [0], [1], [0, 0, 1, 1], [], []>} : vector<8x8xbf16>, vector<8x4xbf16>, vector<8x4xf32> -> vector<8x4xf32>
    %54 = vector.extract_strided_slice %7 {offsets = [0, 8], sizes = [8, 4], strides = [1, 1]} : vector<8x32xf32> to vector<8x4xf32>
    %55 = arith.truncf %54 : vector<8x4xf32> to vector<8x4xbf16>
    %56 = vector.extract_strided_slice %8 {offsets = [0, 8], sizes = [8, 4], strides = [1, 1]} : vector<8x32xf32> to vector<8x4xf32>
    %57 = arith.truncf %56 : vector<8x4xf32> to vector<8x4xbf16>
    %58 = vector.extract_strided_slice %9 {offsets = [0, 8], sizes = [8, 4], strides = [1, 1]} : vector<8x32xf32> to vector<8x4xf32>
    %59 = arith.truncf %58 : vector<8x4xf32> to vector<8x4xbf16>
    %cst_18 = arith.constant dense<0.000000e+00> : vector<8x8xf32>
    %60 = tpu.matmul %55, %57, %cst_18 {dimension_numbers = #tpu.dot_dimension_numbers<[1], [1], [0], [0], [0, 0, 1, 0], [], []>} : vector<8x4xbf16>, vector<8x4xbf16>, vector<8x8xf32> -> vector<8x8xf32>
    %cst_19 = arith.constant dense<0xFF800000> : vector<8xf32>
    %61 = vector.multi_reduction <maximumf>, %60, %cst_19 [1] : vector<8x8xf32> to vector<8xf32>
    %62 = vector.shape_cast %61 : vector<8xf32> to vector<8x1xf32>
    %63 = vector.broadcast %62 : vector<8x1xf32> to vector<8x8xf32>
    %64 = arith.subf %60, %63 : vector<8x8xf32>
    %65 = math.exp %64 : vector<8x8xf32>
    %cst_20 = arith.constant dense<0.000000e+00> : vector<8xf32>
    %66 = vector.multi_reduction <add>, %65, %cst_20 [1] : vector<8x8xf32> to vector<8xf32>
    %67 = vector.shape_cast %66 : vector<8xf32> to vector<8x1xf32>
    %68 = tpu.reciprocal %67 : vector<8x1xf32> -> vector<8x1xf32>
    %69 = vector.broadcast %68 : vector<8x1xf32> to vector<8x8xf32>
    %70 = arith.mulf %65, %69 : vector<8x8xf32>
    %c2 = arith.constant 2 : index
    %c0_21 = arith.constant 0 : index
    %c0_22 = arith.constant 0 : index
    %71 = vector.load %arg3[%c2, %c0_21, %c0_22] : memref<8x8x8xf32, #tpu.memory_space<vmem>>, vector<1x8x8xf32>
    %72 = vector.shape_cast %71 : vector<1x8x8xf32> to vector<8x8xf32>
    %73 = arith.addf %70, %72 : vector<8x8xf32>
    %74 = arith.truncf %73 : vector<8x8xf32> to vector<8x8xbf16>
    %cst_23 = arith.constant dense<0.000000e+00> : vector<8x4xf32>
    %75 = tpu.matmul %74, %59, %cst_23 {dimension_numbers = #tpu.dot_dimension_numbers<[1], [0], [0], [1], [0, 0, 1, 1], [], []>} : vector<8x8xbf16>, vector<8x4xbf16>, vector<8x4xf32> -> vector<8x4xf32>
    %76 = vector.extract_strided_slice %7 {offsets = [0, 12], sizes = [8, 4], strides = [1, 1]} : vector<8x32xf32> to vector<8x4xf32>
    %77 = arith.truncf %76 : vector<8x4xf32> to vector<8x4xbf16>
    %78 = vector.extract_strided_slice %8 {offsets = [0, 12], sizes = [8, 4], strides = [1, 1]} : vector<8x32xf32> to vector<8x4xf32>
    %79 = arith.truncf %78 : vector<8x4xf32> to vector<8x4xbf16>
    %80 = vector.extract_strided_slice %9 {offsets = [0, 12], sizes = [8, 4], strides = [1, 1]} : vector<8x32xf32> to vector<8x4xf32>
    %81 = arith.truncf %80 : vector<8x4xf32> to vector<8x4xbf16>
    %cst_24 = arith.constant dense<0.000000e+00> : vector<8x8xf32>
    %82 = tpu.matmul %77, %79, %cst_24 {dimension_numbers = #tpu.dot_dimension_numbers<[1], [1], [0], [0], [0, 0, 1, 0], [], []>} : vector<8x4xbf16>, vector<8x4xbf16>, vector<8x8xf32> -> vector<8x8xf32>
    %cst_25 = arith.constant dense<0xFF800000> : vector<8xf32>
    %83 = vector.multi_reduction <maximumf>, %82, %cst_25 [1] : vector<8x8xf32> to vector<8xf32>
    %84 = vector.shape_cast %83 : vector<8xf32> to vector<8x1xf32>
    %85 = vector.broadcast %84 : vector<8x1xf32> to vector<8x8xf32>
    %86 = arith.subf %82, %85 : vector<8x8xf32>
    %87 = math.exp %86 : vector<8x8xf32>
    %cst_26 = arith.constant dense<0.000000e+00> : vector<8xf32>
    %88 = vector.multi_reduction <add>, %87, %cst_26 [1] : vector<8x8xf32> to vector<8xf32>
    %89 = vector.shape_cast %88 : vector<8xf32> to vector<8x1xf32>
    %90 = tpu.reciprocal %89 : vector<8x1xf32> -> vector<8x1xf32>
    %91 = vector.broadcast %90 : vector<8x1xf32> to vector<8x8xf32>
    %92 = arith.mulf %87, %91 : vector<8x8xf32>
    %c3 = arith.constant 3 : index
    %c0_27 = arith.constant 0 : index
    %c0_28 = arith.constant 0 : index
    %93 = vector.load %arg3[%c3, %c0_27, %c0_28] : memref<8x8x8xf32, #tpu.memory_space<vmem>>, vector<1x8x8xf32>
    %94 = vector.shape_cast %93 : vector<1x8x8xf32> to vector<8x8xf32>
    %95 = arith.addf %92, %94 : vector<8x8xf32>
    %96 = arith.truncf %95 : vector<8x8xf32> to vector<8x8xbf16>
    %cst_29 = arith.constant dense<0.000000e+00> : vector<8x4xf32>
    %97 = tpu.matmul %96, %81, %cst_29 {dimension_numbers = #tpu.dot_dimension_numbers<[1], [0], [0], [1], [0, 0, 1, 1], [], []>} : vector<8x8xbf16>, vector<8x4xbf16>, vector<8x4xf32> -> vector<8x4xf32>
    %98 = vector.extract_strided_slice %7 {offsets = [0, 16], sizes = [8, 4], strides = [1, 1]} : vector<8x32xf32> to vector<8x4xf32>
    %99 = arith.truncf %98 : vector<8x4xf32> to vector<8x4xbf16>
    %100 = vector.extract_strided_slice %8 {offsets = [0, 16], sizes = [8, 4], strides = [1, 1]} : vector<8x32xf32> to vector<8x4xf32>
    %101 = arith.truncf %100 : vector<8x4xf32> to vector<8x4xbf16>
    %102 = vector.extract_strided_slice %9 {offsets = [0, 16], sizes = [8, 4], strides = [1, 1]} : vector<8x32xf32> to vector<8x4xf32>
    %103 = arith.truncf %102 : vector<8x4xf32> to vector<8x4xbf16>
    %cst_30 = arith.constant dense<0.000000e+00> : vector<8x8xf32>
    %104 = tpu.matmul %99, %101, %cst_30 {dimension_numbers = #tpu.dot_dimension_numbers<[1], [1], [0], [0], [0, 0, 1, 0], [], []>} : vector<8x4xbf16>, vector<8x4xbf16>, vector<8x8xf32> -> vector<8x8xf32>
    %cst_31 = arith.constant dense<0xFF800000> : vector<8xf32>
    %105 = vector.multi_reduction <maximumf>, %104, %cst_31 [1] : vector<8x8xf32> to vector<8xf32>
    %106 = vector.shape_cast %105 : vector<8xf32> to vector<8x1xf32>
    %107 = vector.broadcast %106 : vector<8x1xf32> to vector<8x8xf32>
    %108 = arith.subf %104, %107 : vector<8x8xf32>
    %109 = math.exp %108 : vector<8x8xf32>
    %cst_32 = arith.constant dense<0.000000e+00> : vector<8xf32>
    %110 = vector.multi_reduction <add>, %109, %cst_32 [1] : vector<8x8xf32> to vector<8xf32>
    %111 = vector.shape_cast %110 : vector<8xf32> to vector<8x1xf32>
    %112 = tpu.reciprocal %111 : vector<8x1xf32> -> vector<8x1xf32>
    %113 = vector.broadcast %112 : vector<8x1xf32> to vector<8x8xf32>
    %114 = arith.mulf %109, %113 : vector<8x8xf32>
    %c4 = arith.constant 4 : index
    %c0_33 = arith.constant 0 : index
    %c0_34 = arith.constant 0 : index
    %115 = vector.load %arg3[%c4, %c0_33, %c0_34] : memref<8x8x8xf32, #tpu.memory_space<vmem>>, vector<1x8x8xf32>
    %116 = vector.shape_cast %115 : vector<1x8x8xf32> to vector<8x8xf32>
    %117 = arith.addf %114, %116 : vector<8x8xf32>
    %118 = arith.truncf %117 : vector<8x8xf32> to vector<8x8xbf16>
    %cst_35 = arith.constant dense<0.000000e+00> : vector<8x4xf32>
    %119 = tpu.matmul %118, %103, %cst_35 {dimension_numbers = #tpu.dot_dimension_numbers<[1], [0], [0], [1], [0, 0, 1, 1], [], []>} : vector<8x8xbf16>, vector<8x4xbf16>, vector<8x4xf32> -> vector<8x4xf32>
    %120 = vector.extract_strided_slice %7 {offsets = [0, 20], sizes = [8, 4], strides = [1, 1]} : vector<8x32xf32> to vector<8x4xf32>
    %121 = arith.truncf %120 : vector<8x4xf32> to vector<8x4xbf16>
    %122 = vector.extract_strided_slice %8 {offsets = [0, 20], sizes = [8, 4], strides = [1, 1]} : vector<8x32xf32> to vector<8x4xf32>
    %123 = arith.truncf %122 : vector<8x4xf32> to vector<8x4xbf16>
    %124 = vector.extract_strided_slice %9 {offsets = [0, 20], sizes = [8, 4], strides = [1, 1]} : vector<8x32xf32> to vector<8x4xf32>
    %125 = arith.truncf %124 : vector<8x4xf32> to vector<8x4xbf16>
    %cst_36 = arith.constant dense<0.000000e+00> : vector<8x8xf32>
    %126 = tpu.matmul %121, %123, %cst_36 {dimension_numbers = #tpu.dot_dimension_numbers<[1], [1], [0], [0], [0, 0, 1, 0], [], []>} : vector<8x4xbf16>, vector<8x4xbf16>, vector<8x8xf32> -> vector<8x8xf32>
    %cst_37 = arith.constant dense<0xFF800000> : vector<8xf32>
    %127 = vector.multi_reduction <maximumf>, %126, %cst_37 [1] : vector<8x8xf32> to vector<8xf32>
    %128 = vector.shape_cast %127 : vector<8xf32> to vector<8x1xf32>
    %129 = vector.broadcast %128 : vector<8x1xf32> to vector<8x8xf32>
    %130 = arith.subf %126, %129 : vector<8x8xf32>
    %131 = math.exp %130 : vector<8x8xf32>
    %cst_38 = arith.constant dense<0.000000e+00> : vector<8xf32>
    %132 = vector.multi_reduction <add>, %131, %cst_38 [1] : vector<8x8xf32> to vector<8xf32>
    %133 = vector.shape_cast %132 : vector<8xf32> to vector<8x1xf32>
    %134 = tpu.reciprocal %133 : vector<8x1xf32> -> vector<8x1xf32>
    %135 = vector.broadcast %134 : vector<8x1xf32> to vector<8x8xf32>
    %136 = arith.mulf %131, %135 : vector<8x8xf32>
    %c5 = arith.constant 5 : index
    %c0_39 = arith.constant 0 : index
    %c0_40 = arith.constant 0 : index
    %137 = vector.load %arg3[%c5, %c0_39, %c0_40] : memref<8x8x8xf32, #tpu.memory_space<vmem>>, vector<1x8x8xf32>
    %138 = vector.shape_cast %137 : vector<1x8x8xf32> to vector<8x8xf32>
    %139 = arith.addf %136, %138 : vector<8x8xf32>
    %140 = arith.truncf %139 : vector<8x8xf32> to vector<8x8xbf16>
    %cst_41 = arith.constant dense<0.000000e+00> : vector<8x4xf32>
    %141 = tpu.matmul %140, %125, %cst_41 {dimension_numbers = #tpu.dot_dimension_numbers<[1], [0], [0], [1], [0, 0, 1, 1], [], []>} : vector<8x8xbf16>, vector<8x4xbf16>, vector<8x4xf32> -> vector<8x4xf32>
    %142 = vector.extract_strided_slice %7 {offsets = [0, 24], sizes = [8, 4], strides = [1, 1]} : vector<8x32xf32> to vector<8x4xf32>
    %143 = arith.truncf %142 : vector<8x4xf32> to vector<8x4xbf16>
    %144 = vector.extract_strided_slice %8 {offsets = [0, 24], sizes = [8, 4], strides = [1, 1]} : vector<8x32xf32> to vector<8x4xf32>
    %145 = arith.truncf %144 : vector<8x4xf32> to vector<8x4xbf16>
    %146 = vector.extract_strided_slice %9 {offsets = [0, 24], sizes = [8, 4], strides = [1, 1]} : vector<8x32xf32> to vector<8x4xf32>
    %147 = arith.truncf %146 : vector<8x4xf32> to vector<8x4xbf16>
    %cst_42 = arith.constant dense<0.000000e+00> : vector<8x8xf32>
    %148 = tpu.matmul %143, %145, %cst_42 {dimension_numbers = #tpu.dot_dimension_numbers<[1], [1], [0], [0], [0, 0, 1, 0], [], []>} : vector<8x4xbf16>, vector<8x4xbf16>, vector<8x8xf32> -> vector<8x8xf32>
    %cst_43 = arith.constant dense<0xFF800000> : vector<8xf32>
    %149 = vector.multi_reduction <maximumf>, %148, %cst_43 [1] : vector<8x8xf32> to vector<8xf32>
    %150 = vector.shape_cast %149 : vector<8xf32> to vector<8x1xf32>
    %151 = vector.broadcast %150 : vector<8x1xf32> to vector<8x8xf32>
    %152 = arith.subf %148, %151 : vector<8x8xf32>
    %153 = math.exp %152 : vector<8x8xf32>
    %cst_44 = arith.constant dense<0.000000e+00> : vector<8xf32>
    %154 = vector.multi_reduction <add>, %153, %cst_44 [1] : vector<8x8xf32> to vector<8xf32>
    %155 = vector.shape_cast %154 : vector<8xf32> to vector<8x1xf32>
    %156 = tpu.reciprocal %155 : vector<8x1xf32> -> vector<8x1xf32>
    %157 = vector.broadcast %156 : vector<8x1xf32> to vector<8x8xf32>
    %158 = arith.mulf %153, %157 : vector<8x8xf32>
    %c6 = arith.constant 6 : index
    %c0_45 = arith.constant 0 : index
    %c0_46 = arith.constant 0 : index
    %159 = vector.load %arg3[%c6, %c0_45, %c0_46] : memref<8x8x8xf32, #tpu.memory_space<vmem>>, vector<1x8x8xf32>
    %160 = vector.shape_cast %159 : vector<1x8x8xf32> to vector<8x8xf32>
    %161 = arith.addf %158, %160 : vector<8x8xf32>
    %162 = arith.truncf %161 : vector<8x8xf32> to vector<8x8xbf16>
    %cst_47 = arith.constant dense<0.000000e+00> : vector<8x4xf32>
    %163 = tpu.matmul %162, %147, %cst_47 {dimension_numbers = #tpu.dot_dimension_numbers<[1], [0], [0], [1], [0, 0, 1, 1], [], []>} : vector<8x8xbf16>, vector<8x4xbf16>, vector<8x4xf32> -> vector<8x4xf32>
    %164 = vector.extract_strided_slice %7 {offsets = [0, 28], sizes = [8, 4], strides = [1, 1]} : vector<8x32xf32> to vector<8x4xf32>
    %165 = arith.truncf %164 : vector<8x4xf32> to vector<8x4xbf16>
    %166 = vector.extract_strided_slice %8 {offsets = [0, 28], sizes = [8, 4], strides = [1, 1]} : vector<8x32xf32> to vector<8x4xf32>
    %167 = arith.truncf %166 : vector<8x4xf32> to vector<8x4xbf16>
    %168 = vector.extract_strided_slice %9 {offsets = [0, 28], sizes = [8, 4], strides = [1, 1]} : vector<8x32xf32> to vector<8x4xf32>
    %169 = arith.truncf %168 : vector<8x4xf32> to vector<8x4xbf16>
    %cst_48 = arith.constant dense<0.000000e+00> : vector<8x8xf32>
    %170 = tpu.matmul %165, %167, %cst_48 {dimension_numbers = #tpu.dot_dimension_numbers<[1], [1], [0], [0], [0, 0, 1, 0], [], []>} : vector<8x4xbf16>, vector<8x4xbf16>, vector<8x8xf32> -> vector<8x8xf32>
    %cst_49 = arith.constant dense<0xFF800000> : vector<8xf32>
    %171 = vector.multi_reduction <maximumf>, %170, %cst_49 [1] : vector<8x8xf32> to vector<8xf32>
    %172 = vector.shape_cast %171 : vector<8xf32> to vector<8x1xf32>
    %173 = vector.broadcast %172 : vector<8x1xf32> to vector<8x8xf32>
    %174 = arith.subf %170, %173 : vector<8x8xf32>
    %175 = math.exp %174 : vector<8x8xf32>
    %cst_50 = arith.constant dense<0.000000e+00> : vector<8xf32>
    %176 = vector.multi_reduction <add>, %175, %cst_50 [1] : vector<8x8xf32> to vector<8xf32>
    %177 = vector.shape_cast %176 : vector<8xf32> to vector<8x1xf32>
    %178 = tpu.reciprocal %177 : vector<8x1xf32> -> vector<8x1xf32>
    %179 = vector.broadcast %178 : vector<8x1xf32> to vector<8x8xf32>
    %180 = arith.mulf %175, %179 : vector<8x8xf32>
    %c7 = arith.constant 7 : index
    %c0_51 = arith.constant 0 : index
    %c0_52 = arith.constant 0 : index
    %181 = vector.load %arg3[%c7, %c0_51, %c0_52] : memref<8x8x8xf32, #tpu.memory_space<vmem>>, vector<1x8x8xf32>
    %182 = vector.shape_cast %181 : vector<1x8x8xf32> to vector<8x8xf32>
    %183 = arith.addf %180, %182 : vector<8x8xf32>
    %184 = arith.truncf %183 : vector<8x8xf32> to vector<8x8xbf16>
    %cst_53 = arith.constant dense<0.000000e+00> : vector<8x4xf32>
    %185 = tpu.matmul %184, %169, %cst_53 {dimension_numbers = #tpu.dot_dimension_numbers<[1], [0], [0], [1], [0, 0, 1, 1], [], []>} : vector<8x8xbf16>, vector<8x4xbf16>, vector<8x4xf32> -> vector<8x4xf32>
    %186 = tpu.concatenate %31, %53, %75, %97, %119, %141, %163, %185 in 1 : vector<8x4xf32>, vector<8x4xf32>, vector<8x4xf32>, vector<8x4xf32>, vector<8x4xf32>, vector<8x4xf32>, vector<8x4xf32>, vector<8x4xf32> -> vector<8x32xf32>
    %cst_54 = arith.constant dense<0.000000e+00> : vector<8xf32>
    %187 = vector.multi_reduction <add>, %186, %cst_54 [1] : vector<8x32xf32> to vector<8xf32>
    %188 = vector.shape_cast %187 : vector<8xf32> to vector<8x1xf32>
    %cst_55 = arith.constant 3.200000e+01 : f32
    %189 = vector.broadcast %cst_55 : f32 to vector<8x1xf32>
    %190 = arith.divf %188, %189 : vector<8x1xf32>
    %191 = arith.mulf %186, %186 : vector<8x32xf32>
    %cst_56 = arith.constant dense<0.000000e+00> : vector<8xf32>
    %192 = vector.multi_reduction <add>, %191, %cst_56 [1] : vector<8x32xf32> to vector<8xf32>
    %193 = vector.shape_cast %192 : vector<8xf32> to vector<8x1xf32>
    %cst_57 = arith.constant 3.200000e+01 : f32
    %194 = vector.broadcast %cst_57 : f32 to vector<8x1xf32>
    %195 = arith.divf %193, %194 : vector<8x1xf32>
    %196 = arith.mulf %190, %190 : vector<8x1xf32>
    %197 = arith.subf %195, %196 : vector<8x1xf32>
    %cst_58 = arith.constant 9.99999974E-6 : f32
    %198 = vector.broadcast %cst_58 : f32 to vector<8x1xf32>
    %199 = arith.addf %197, %198 : vector<8x1xf32>
    %200 = math.rsqrt %199 : vector<8x1xf32>
    %201 = vector.broadcast %190 : vector<8x1xf32> to vector<8x32xf32>
    %202 = arith.subf %186, %201 : vector<8x32xf32>
    %203 = vector.broadcast %200 : vector<8x1xf32> to vector<8x32xf32>
    %204 = arith.mulf %202, %203 : vector<8x32xf32>
    %c0_59 = arith.constant 0 : index
    %c0_60 = arith.constant 0 : index
    %205 = vector.load %arg4[%c0_59, %c0_60] : memref<1x32xf32, #tpu.memory_space<vmem>>, vector<1x32xf32>
    %206 = vector.broadcast %205 : vector<1x32xf32> to vector<8x32xf32>
    %207 = arith.mulf %204, %206 : vector<8x32xf32>
    %c0_61 = arith.constant 0 : index
    %c0_62 = arith.constant 0 : index
    %208 = vector.load %arg5[%c0_61, %c0_62] : memref<1x32xf32, #tpu.memory_space<vmem>>, vector<1x32xf32>
    %209 = vector.broadcast %208 : vector<1x32xf32> to vector<8x32xf32>
    %210 = arith.addf %207, %209 : vector<8x32xf32>
    %c0_63 = arith.constant 0 : index
    %c0_64 = arith.constant 0 : index
    %c0_65 = arith.constant 0 : index
    %211 = vector.load %arg6[%c0_63, %c0_64, %c0_65] : memref<1x8x32xf32, #tpu.memory_space<vmem>>, vector<1x8x32xf32>
    %212 = vector.shape_cast %211 : vector<1x8x32xf32> to vector<8x32xf32>
    %213 = vector.shape_cast %210 : vector<8x32xf32> to vector<1x8x32xf32>
    tpu.vector_store %arg6[%c0_63, %c0_64, %c0_65], %213 {strides = array<i32>} : memref<1x8x32xf32, #tpu.memory_space<vmem>>, vector<1x8x32xf32>,
    return
  }
  func.func @transform_0(%arg0: i32) -> (i32, i32, i32) {
    %c0_i32 = arith.constant 0 : i32
    %c0_i32_0 = arith.constant 0 : i32
    %c0_i32_1 = arith.constant 0 : i32
    return %arg0, %c0_i32, %c0_i32_0 : i32, i32, i32
  }
  func.func @transform_1(%arg0: i32) -> (i32, i32) {
    %c0_i32 = arith.constant 0 : i32
    %c0_i32_0 = arith.constant 0 : i32
    %c0_i32_1 = arith.constant 0 : i32
    return %c0_i32, %c0_i32_0 : i32, i32
  }
  func.func @transform_2(%arg0: i32) -> (i32, i32, i32) {
    %c0_i32 = arith.constant 0 : i32
    %c0_i32_0 = arith.constant 0 : i32
    %c0_i32_1 = arith.constant 0 : i32
    %c0_i32_2 = arith.constant 0 : i32
    return %c0_i32, %c0_i32_0, %c0_i32_1 : i32, i32, i32
  }
  func.func @transform_3(%arg0: i32) -> (i32, i32) {
    %c0_i32 = arith.constant 0 : i32
    %c0_i32_0 = arith.constant 0 : i32
    %c0_i32_1 = arith.constant 0 : i32
    return %c0_i32, %c0_i32_0 : i32, i32
  }
  func.func @transform_4(%arg0: i32) -> (i32, i32) {
    %c0_i32 = arith.constant 0 : i32
    %c0_i32_0 = arith.constant 0 : i32
    %c0_i32_1 = arith.constant 0 : i32
    return %c0_i32, %c0_i32_0 : i32, i32
  }
  func.func @transform_5(%arg0: i32) -> (i32, i32, i32) {
    %c0_i32 = arith.constant 0 : i32
    %c0_i32_0 = arith.constant 0 : i32
    %c0_i32_1 = arith.constant 0 : i32
    return %arg0, %c0_i32, %c0_i32_0 : i32, i32, i32
  }
}

</mosaic_0001>

<llo_original>
// kernel: attention_rel_scl.1
$region0: #{attention_rel_scl.1}
  #allocation0 [shape = 'u32[]', space=smem, size = 0x4, offset = 0x4, fixed_abs, tag = 'smem constant byte address 0x4 - core index']
  #allocation1 [shape = 'u32[144,128]{1,0:T(1,128)}', space=vmem, size = 0x12000, scoped, tag = 'internal scratch']
  %s0 = inlined_call_operand.vmem [shape: f32[2,8,32], index: 0, kind: input, shape index: {}]
  %s1 = inlined_call_operand.vmem [shape: bf16[32,96], index: 1, kind: input, shape index: {}]
  %s2 = inlined_call_operand.vmem [shape: f32[8,8,8], index: 2, kind: input, shape index: {}]
  %s3 = inlined_call_operand.vmem [shape: f32[1,32], index: 3, kind: input, shape index: {}]
  %s4 = inlined_call_operand.vmem [shape: f32[1,32], index: 4, kind: input, shape index: {}]
  %s5 = inlined_call_operand.hbm [shape: f32[2,8,32], index: 5, kind: output, shape index: {}]
  %s6 = sld [smem:[#allocation0]]
  $region53: #{attention_rel_scl.1} parent=0
    _
  %s8 = ssub.s32 1, %s6
  %s9 = scalar_select 0, %s8, %s6
  $region1: #{attention_rel_scl.1} parent=0
    #allocation2 [shape = 'u8[8192]{0}', space=vmem, size = 0x2000, scoped, tag = 'output window, operand 0']
    #allocation3 [shape = 's32[2]{0}', space=sflag, size = 0x8, scoped, tag = 'scoped memory for attention_rel_scl.1']
    %10 = vsyncpa [#allocation3], 0
    %s11 = scalar_lea.sflag [#allocation3], 1
    %12 = vsyncpa %s11, 0
    loop: start=0, step=1, limit=4
    $region2: #{attention_rel_scl.1} parent=1 // loop_pre_header
      _
    $region3: #{attention_rel_scl.1} parent=1 // loop_header
      %s14 = sphi 0, %s18
      %p15 = scmp.ge.s32.totalorder %s14, 4
      %s24 = sphi 0, %s26
      %s27 = sphi 0, %s24
      %s28 = sphi 0, %s27
      %s44 = sphi 0, %s28
      %s48 = sphi 0, %s48
      %s50 = sphi 0, %s48
      %s51 = sphi 0, %s50
      %s65 = sphi 0, %s51
      %s69 = sphi 0, %s69
      %s71 = sphi 0, %s69
      %s72 = sphi 0, %s71
      %s86 = sphi 0, %s72
      %s90 = sphi 0, %s90
      %s92 = sphi 0, %s90
      %s93 = sphi 0, %s92
      %s107 = sphi 0, %s93
      %s111 = sphi 0, %s111
      %s113 = sphi 0, %s111
      %s114 = sphi 0, %s113
      %s128 = sphi 0, %s114
      %s134 = sphi 0, %s136
      %s137 = sphi 0, %s134
      %s138 = sphi 0, %s137
      %s154 = sphi 0, %s138
    $region4: #{attention_rel_scl.1} parent=1 // loop_header_branch
      %17 = sbr.rel (%p15) target = $region8
    $region5: #{attention_rel_scl.1} parent=1 // loop_body
      %s19 = ssub.s32 %s14, 1
      %s20 = ssub.s32 %s14, 2
      %s21 = sadd.s32 %s14, 1
      %s22 = ssub.s32 %s14, %s21
      %p23 = scmp.eq.s32.totalorder %s22, 0
      %s25 = sadd.s32 %s24, 1
      %s26 = scalar_select %p23, %s24, %s25
      %p29 = pneg %p23
      %p30 = scmp.eq.s32.totalorder %s14, 1
      %p31 = por %p29, %p30
      %p32 = scmp.ne.s32.totalorder %s24, %s27
      %p33 = scmp.eq.s32.totalorder %s14, 0
      %p34 = por %p32, %p33
      %p35 = scmp.ne.s32.totalorder %s24, %s27
      %p36 = scmp.eq.s32.totalorder %s19, 1
      %p37 = por %p35, %p36
      %p38 = scmp.ne.s32.totalorder %s27, %s28
      %p39 = scmp.eq.s32.totalorder %s19, 0
      %p40 = por %p38, %p39
      %p41 = scmp.ne.s32.totalorder %s27, %s28
      %p42 = scmp.eq.s32.totalorder %s20, 1
      %p43 = por %p41, %p42
      %p45 = scmp.ne.s32.totalorder %s28, %s44
      %p46 = scmp.eq.s32.totalorder %s20, 0
      %p47 = por %p45, %p46
      %s49 = sadd.s32 %s48, 1
      %p52 = scmp.eq.s32.totalorder %s14, 1
      %p53 = scmp.ne.s32.totalorder %s48, %s50
      %p54 = scmp.eq.s32.totalorder %s14, 0
      %p55 = por %p53, %p54
      %p56 = scmp.ne.s32.totalorder %s48, %s50
      %p57 = scmp.eq.s32.totalorder %s19, 1
      %p58 = por %p56, %p57
      %p59 = scmp.ne.s32.totalorder %s50, %s51
      %p60 = scmp.eq.s32.totalorder %s19, 0
      %p61 = por %p59, %p60
      %p62 = scmp.ne.s32.totalorder %s50, %s51
      %p63 = scmp.eq.s32.totalorder %s20, 1
      %p64 = por %p62, %p63
      %p66 = scmp.ne.s32.totalorder %s51, %s65
      %p67 = scmp.eq.s32.totalorder %s20, 0
      %p68 = por %p66, %p67
      %s70 = sadd.s32 %s69, 1
      %p73 = scmp.eq.s32.totalorder %s14, 1
      %p74 = scmp.ne.s32.totalorder %s69, %s71
      %p75 = scmp.eq.s32.totalorder %s14, 0
      %p76 = por %p74, %p75
      %p77 = scmp.ne.s32.totalorder %s69, %s71
      %p78 = scmp.eq.s32.totalorder %s19, 1
      %p79 = por %p77, %p78
      %p80 = scmp.ne.s32.totalorder %s71, %s72
      %p81 = scmp.eq.s32.totalorder %s19, 0
      %p82 = por %p80, %p81
      %p83 = scmp.ne.s32.totalorder %s71, %s72
      %p84 = scmp.eq.s32.totalorder %s20, 1
      %p85 = por %p83, %p84
      %p87 = scmp.ne.s32.totalorder %s72, %s86
      %p88 = scmp.eq.s32.totalorder %s20, 0
      %p89 = por %p87, %p88
      %s91 = sadd.s32 %s90, 1
      %p94 = scmp.eq.s32.totalorder %s14, 1
      %p95 = scmp.ne.s32.totalorder %s90, %s92
      %p96 = scmp.eq.s32.totalorder %s14, 0
      %p97 = por %p95, %p96
      %p98 = scmp.ne.s32.totalorder %s90, %s92
      %p99 = scmp.eq.s32.totalorder %s19, 1
      %p100 = por %p98, %p99
      %p101 = scmp.ne.s32.totalorder %s92, %s93
      %p102 = scmp.eq.s32.totalorder %s19, 0
      %p103 = por %p101, %p102
      %p104 = scmp.ne.s32.totalorder %s92, %s93
      %p105 = scmp.eq.s32.totalorder %s20, 1
      %p106 = por %p104, %p105
      %p108 = scmp.ne.s32.totalorder %s93, %s107
      %p109 = scmp.eq.s32.totalorder %s20, 0
      %p110 = por %p108, %p109
      %s112 = sadd.s32 %s111, 1
      %p115 = scmp.eq.s32.totalorder %s14, 1
      %p116 = scmp.ne.s32.totalorder %s111, %s113
      %p117 = scmp.eq.s32.totalorder %s14, 0
      %p118 = por %p116, %p117
      %p119 = scmp.ne.s32.totalorder %s111, %s113
      %p120 = scmp.eq.s32.totalorder %s19, 1
      %p121 = por %p119, %p120
      %p122 = scmp.ne.s32.totalorder %s113, %s114
      %p123 = scmp.eq.s32.totalorder %s19, 0
      %p124 = por %p122, %p123
      %p125 = scmp.ne.s32.totalorder %s113, %s114
      %p126 = scmp.eq.s32.totalorder %s20, 1
      %p127 = por %p125, %p126
      %p129 = scmp.ne.s32.totalorder %s114, %s128
      %p130 = scmp.eq.s32.totalorder %s20, 0
      %p131 = por %p129, %p130
      %s132 = ssub.s32 %s14, %s21
      %p133 = scmp.eq.s32.totalorder %s132, 0
      %s135 = sadd.s32 %s134, 1
      %s136 = scalar_select %p133, %s134, %s135
      %p139 = pneg %p133
      %p140 = scmp.eq.s32.totalorder %s14, 1
      %p141 = por %p139, %p140
      %p142 = scmp.ne.s32.totalorder %s134, %s137
      %p143 = scmp.eq.s32.totalorder %s14, 0
      %p144 = por %p142, %p143
      %p145 = scmp.ne.s32.totalorder %s134, %s137
      %p146 = scmp.eq.s32.totalorder %s19, 1
      %p147 = por %p145, %p146
      %p148 = scmp.ne.s32.totalorder %s137, %s138
      %p149 = scmp.eq.s32.totalorder %s19, 0
      %p150 = por %p148, %p149
      %p151 = scmp.ne.s32.totalorder %s137, %s138
      %p152 = scmp.eq.s32.totalorder %s20, 1
      %p153 = por %p151, %p152
      %p155 = scmp.ne.s32.totalorder %s138, %s154
      %p156 = scmp.eq.s32.totalorder %s20, 0
      %p157 = por %p155, %p156
      %p158 = scmp.le.s32.totalorder 1, %s14
      %p159 = scmp.lt.s32.totalorder %s14, 3
      %p160 = pnand %p158, %p159
      %p161 = pneg %p160
      // Predicated region
      $region9: #{attention_rel_scl.1} parent=5 // pred_check
        _
      $region10: #{attention_rel_scl.1} parent=5 // pred_check_branch
        %163 = sbr.rel (%p160) target = $region12
      $region11: #{attention_rel_scl.1} parent=5 // pred_region
        %s164 = ssub.s32 %s14, 1
        // Predicated region
        $region13: #{attention_rel_scl.1} parent=11 // pred_check
          %p165 = pneg %p61
        $region14: #{attention_rel_scl.1} parent=11 // pred_check_branch
          %167 = sbr.rel (%p165) target = $region16
        $region15: #{attention_rel_scl.1} parent=11 // pred_region
          _
        $region16: #{attention_rel_scl.1} parent=11 // pred_fallthru
          _
        // Predicated region
        $region17: #{attention_rel_scl.1} parent=11 // pred_check
          %p168 = pneg %p82
        $region18: #{attention_rel_scl.1} parent=11 // pred_check_branch
          %170 = sbr.rel (%p168) target = $region20
        $region19: #{attention_rel_scl.1} parent=11 // pred_region
          _
        $region20: #{attention_rel_scl.1} parent=11 // pred_fallthru
          _
        // Predicated region
        $region21: #{attention_rel_scl.1} parent=11 // pred_check
          %p171 = pneg %p103
        $region22: #{attention_rel_scl.1} parent=11 // pred_check_branch
          %173 = sbr.rel (%p171) target = $region24
        $region23: #{attention_rel_scl.1} parent=11 // pred_region
          _
        $region24: #{attention_rel_scl.1} parent=11 // pred_fallthru
          _
        // Predicated region
        $region25: #{attention_rel_scl.1} parent=11 // pred_check
          %p174 = pneg %p124
        $region26: #{attention_rel_scl.1} parent=11 // pred_check_branch
          %176 = sbr.rel (%p174) target = $region28
        $region27: #{attention_rel_scl.1} parent=11 // pred_region
          _
        $region28: #{attention_rel_scl.1} parent=11 // pred_fallthru
          _
      $region12: #{attention_rel_scl.1} parent=5 // pred_fallthru
        _
      %p177 = scmp.lt.s32.totalorder %s14, 2
      // Predicated region
      $region29: #{attention_rel_scl.1} parent=5 // pred_check
        %p178 = pneg %p177
      $region30: #{attention_rel_scl.1} parent=5 // pred_check_branch
        %180 = sbr.rel (%p178) target = $region32
      $region31: #{attention_rel_scl.1} parent=5 // pred_region
        // Predicated region
        $region33: #{attention_rel_scl.1} parent=31 // pred_check
          %p181 = pneg %p34
        $region34: #{attention_rel_scl.1} parent=31 // pred_check_branch
          %183 = sbr.rel (%p181) target = $region36
        $region35: #{attention_rel_scl.1} parent=31 // pred_region
          %p184 = scmp.lt.s32.totalorder %s14, 1
          %s185 = scalar_select %p184, %s14, 1
          %s186 = smul.addr %s185, 8
          %s187 = scalar_lea.vmem %s0, %s186
        $region36: #{attention_rel_scl.1} parent=31 // pred_fallthru
          _
      $region32: #{attention_rel_scl.1} parent=5 // pred_fallthru
        _
      %p188 = scmp.le.s32.totalorder 1, %s14
      %p189 = scmp.lt.s32.totalorder %s14, 3
      %p190 = pnand %p188, %p189
      %p191 = pneg %p190
      // Predicated region
      $region37: #{attention_rel_scl.1} parent=5 // pred_check
        _
      $region38: #{attention_rel_scl.1} parent=5 // pred_check_branch
        %193 = sbr.rel (%p190) target = $region40
      $region39: #{attention_rel_scl.1} parent=5 // pred_region
        %s194 = ssub.s32 %s14, 1
        %p195 = scmp.lt.s32.totalorder %s19, 1
        %s196 = scalar_select %p195, %s19, 1
        %s197 = smul.addr %s196, 8
        %s198 = scalar_lea.vmem %s0, %s197
        %p199 = pneg %p40
        %p200 = pneg %p37
        %p201 = pneg %p61
        %p202 = pneg %p58
        %p203 = pneg %p82
        %p204 = pneg %p79
        %p205 = pneg %p103
        %p206 = pneg %p100
        %p207 = pneg %p124
        %p208 = pneg %p121
        %p209 = pneg %p150
        %p210 = pneg %p147
        %s211 = sand.u32 %s137, 1
        %s212 = scalar_lea.sflag [#allocation3], %s211
        %s213 = sand.u32 %s137, 1
        %s214 = smul.addr %s213, 8
        %s215 = scalar_lea.vmem [#allocation2], %s214
        %p216 = scmp.lt.s32.totalorder %s19, 1
        %s217 = scalar_select %p216, %s19, 1
        %s218 = smul.addr %s217, 8
        %s219 = scalar_lea.vmem %s0, %s218
        %v221 = vld [vmem:[%s219] sm:$0xff]
        %v222 = vpack.c.bf16 %v221, %v221
        %v223 = vld [vmem:[%s1] sm:$0xf]
        %v224 = vld [vmem:[%s1 + $0x4] sm:$0xf]
        %v225 = vld [vmem:[%s1 + $0x8] sm:$0xf]
        %v226 = vld [vmem:[%s1 + $0xc] sm:$0xf]
        %v231 = vunpack.c.l.b16 %v223
        %v232 = vunpack.c.l.b16 %v224
        %v233 = vunpack.c.l.b16 %v225
        %v234 = vunpack.c.l.b16 %v226
        %v235 = vpack.c.b16 %v232, %v231
        %v236 = vpack.c.b16 %v234, %v233
        %vm239 = vcmask 261120
        %v241 = vsel %vm239, %v222, 0
        %243 = vmatprep.subr.bf16.mxu0 0
        %244 = vmatpush1.bf16.msra.mxu0 0
        %245 = vmatprep.subr.bf16.mxu0 0
        %246 = vmatpush1.bf16.msra.mxu0 0
        %247 = vmatprep.subr.bf16.mxu0 0
        %248 = vmatpush1.bf16.msra.mxu0 0
        %249 = vmatprep.subr.bf16.mxu0 0
        %250 = vmatpush1.bf16.msra.mxu0 0
        %251 = vmatprep.subr.bf16.mxu0 0
        %252 = vmatpush1.bf16.msra.mxu0 0
        %253 = vmatprep.subr.bf16.mxu0 0
        %254 = vmatpush1.bf16.msra.mxu0 0
        %255 = vmatprep.subr.bf16.mxu0 0
        %256 = vmatpush1.bf16.msra.mxu0 %v236
        %257 = vmatprep.subr.bf16.mxu0 0
        %258 = vmatpush1.bf16.msra.mxu0 %v235
        %259 = vmatprep.subr.bf16.mxu0 0
        %260 = vmatpush2.bf16.msra.mxu0 0
        %261 = vmatprep.subr.bf16.mxu0 0
        %262 = vmatpush2.bf16.msra.mxu0 0
        %263 = vmatprep.subr.bf16.mxu0 0
        %264 = vmatpush2.bf16.msra.mxu0 0
        %265 = vmatprep.subr.bf16.mxu0 0
        %266 = vmatpush2.bf16.msra.mxu0 0
        %267 = vmatprep.subr.bf16.mxu0 0
        %268 = vmatpush2.bf16.msra.mxu0 0
        %269 = vmatprep.subr.bf16.mxu0 0
        %270 = vmatpush2.bf16.msra.mxu0 0
        %271 = vmatprep.subr.bf16.mxu0 0
        %272 = vmatpush2.bf16.msra.mxu0 0
        %273 = vmatprep.subr.bf16.mxu0 0
        %274 = vmatpush2.bf16.msra.mxu0 0
        %275 = vmatprep.mubr.bf16.mxu0 0
        %276 = vmatmul.mubr.bf16.gmra.mxu0 %v241
        %v277 = vpop.f32.mrf.mxu0
        %v278 = vadd.f32 0.0, %v277
        %v279 = vpop.f32.mrf.mxu0
        %v280 = vpop.f32.mrf.mxu0
        %v281 = vpop.f32.mrf.mxu0
        %282 = vdwg.mxu0
        %v283 = vmul.f32 %v278, 0.17677669
        %v284 = vpack.c.bf16 %v283, %v283
        %v285 = vpack.c.bf16 %v278, %v278
        %287 = vrot.lane.b32.xlu0 %v285, 96
        %v288 = vpop.permute.xlu0 %287
        %vm289 = vcmask 31744
        %v291 = vsel %vm289, %v284, 0
        %v294 = vsel %vm289, %v288, 0
        %296 = vmatprep.subr.bf16.mxu0 0
        %297 = vmatpush1.bf16.xpose.msra.mxu0 0
        %298 = vmatprep.subr.bf16.mxu0 0
        %299 = vmatpush1.bf16.xpose.msra.mxu0 0
        %300 = vmatprep.subr.bf16.mxu0 0
        %301 = vmatpush1.bf16.xpose.msra.mxu0 0
        %302 = vmatprep.subr.bf16.mxu0 0
        %303 = vmatpush1.bf16.xpose.msra.mxu0 0
        %304 = vmatprep.subr.bf16.mxu0 0
        %305 = vmatpush1.bf16.xpose.msra.mxu0 0
        %306 = vmatprep.subr.bf16.mxu0 0
        %307 = vmatpush1.bf16.xpose.msra.mxu0 0
        %308 = vmatprep.subr.bf16.mxu0 0
        %309 = vmatpush1.bf16.xpose.msra.mxu0 0
        %310 = vmatprep.subr.bf16.mxu0 0
        %311 = vmatpush1.bf16.xpose.msra.mxu0 %v294
        %312 = vmatprep.subr.bf16.mxu0 0
        %313 = vmatpush2.bf16.xpose.msra.mxu0 0
        %314 = vmatprep.subr.bf16.mxu0 0
        %315 = vmatpush2.bf16.xpose.msra.mxu0 0
        %316 = vmatprep.subr.bf16.mxu0 0
        %317 = vmatpush2.bf16.xpose.msra.mxu0 0
        %318 = vmatprep.subr.bf16.mxu0 0
        %319 = vmatpush2.bf16.xpose.msra.mxu0 0
        %320 = vmatprep.subr.bf16.mxu0 0
        %321 = vmatpush2.bf16.xpose.msra.mxu0 0
        %322 = vmatprep.subr.bf16.mxu0 0
        %323 = vmatpush2.bf16.xpose.msra.mxu0 0
        %324 = vmatprep.subr.bf16.mxu0 0
        %325 = vmatpush2.bf16.xpose.msra.mxu0 0
        %326 = vmatprep.subr.bf16.mxu0 0
        %327 = vmatpush2.bf16.xpose.msra.mxu0 0
        %328 = vmatprep.mubr.bf16.mxu0 0
        %329 = vmatmul.mubr.bf16.gmra.mxu0 %v291
        %v330 = vpop.f32.mrf.mxu0
        %v331 = vadd.f32 0.0, %v330
        %v332 = vpop.f32.mrf.mxu0
        %v333 = vpop.f32.mrf.mxu0
        %v334 = vpop.f32.mrf.mxu0
        %335 = vdwg.mxu0
        %vm336 = vcmask 64512
        %v337 = vsel %vm336, %v331, -inf
        %338 = vmax.xlane.f32.xlu0 %v337
        %v339 = vpop.xlane.xlu0 %338
        %v340 = vsub.f32 %v331, %v339
        %v341 = vmul.f32 %v340, 1.442695
        %v342 = vpow.pop %v341
        %v343 = vsel %vm336, %v342, 0.0
        %344 = vadd.xlane.f32.xlu0 %v343
        %v345 = vpop.xlane.xlu0 %344
        %v346 = vrcp.pop %v345
        %v347 = vmul.f32 %v342, %v346
        %v348 = vld [vmem:[%s2] sm:$0xff]
        %v349 = vadd.f32 %v347, %v348
        %v350 = vpack.c.bf16 %v349, %v349
        %351 = vrot.lane.b32.xlu0 %v285, 64
        %v352 = vpop.permute.xlu0 %351
        %v354 = vsel %vm336, %v350, 0
        %vm356 = vcmask 1043456
        %v358 = vsel %vm356, %v352, 0
        %360 = vmatprep.subr.bf16.mxu0 0
        %361 = vmatpush1.bf16.msra.mxu0 0
        %362 = vmatprep.subr.bf16.mxu0 0
        %363 = vmatpush1.bf16.msra.mxu0 0
        %364 = vmatprep.subr.bf16.mxu0 0
        %365 = vmatpush1.bf16.msra.mxu0 0
        %366 = vmatprep.subr.bf16.mxu0 0
        %367 = vmatpush1.bf16.msra.mxu0 0
        %368 = vmatprep.subr.bf16.mxu0 0
        %369 = vmatpush1.bf16.msra.mxu0 0
        %370 = vmatprep.subr.bf16.mxu0 0
        %371 = vmatpush1.bf16.msra.mxu0 0
        %372 = vmatprep.subr.bf16.mxu0 0
        %373 = vmatpush1.bf16.msra.mxu0 0
        %374 = vmatprep.subr.bf16.mxu0 0
        %375 = vmatpush1.bf16.msra.mxu0 %v358
        %376 = vmatprep.subr.bf16.mxu0 0
        %377 = vmatpush2.bf16.msra.mxu0 0
        %378 = vmatprep.subr.bf16.mxu0 0
        %379 = vmatpush2.bf16.msra.mxu0 0
        %380 = vmatprep.subr.bf16.mxu0 0
        %381 = vmatpush2.bf16.msra.mxu0 0
        %382 = vmatprep.subr.bf16.mxu0 0
        %383 = vmatpush2.bf16.msra.mxu0 0
        %384 = vmatprep.subr.bf16.mxu0 0
        %385 = vmatpush2.bf16.msra.mxu0 0
        %386 = vmatprep.subr.bf16.mxu0 0
        %387 = vmatpush2.bf16.msra.mxu0 0
        %388 = vmatprep.subr.bf16.mxu0 0
        %389 = vmatpush2.bf16.msra.mxu0 0
        %390 = vmatprep.subr.bf16.mxu0 0
        %391 = vmatpush2.bf16.msra.mxu0 0
        %392 = vmatprep.mubr.bf16.mxu0 0
        %393 = vmatmul.mubr.bf16.gmra.mxu0 %v354
        %v394 = vpop.f32.mrf.mxu0
        %v395 = vadd.f32 0.0, %v394
        %v396 = vpop.f32.mrf.mxu0
        %v397 = vpop.f32.mrf.mxu0
        %v398 = vpop.f32.mrf.mxu0
        %399 = vdwg.mxu0
        %401 = vrot.lane.b32.xlu0 %v284, 124
        %v402 = vpop.permute.xlu0 %401
        %403 = vrot.lane.b32.xlu0 %v285, 92
        %v404 = vpop.permute.xlu0 %403
        %v406 = vsel %vm289, %v402, 0
        %v409 = vsel %vm289, %v404, 0
        %411 = vmatprep.subr.bf16.mxu0 0
        %412 = vmatpush1.bf16.xpose.msra.mxu0 0
        %413 = vmatprep.subr.bf16.mxu0 0
        %414 = vmatpush1.bf16.xpose.msra.mxu0 0
        %415 = vmatprep.subr.bf16.mxu0 0
        %416 = vmatpush1.bf16.xpose.msra.mxu0 0
        %417 = vmatprep.subr.bf16.mxu0 0
        %418 = vmatpush1.bf16.xpose.msra.mxu0 0
        %419 = vmatprep.subr.bf16.mxu0 0
        %420 = vmatpush1.bf16.xpose.msra.mxu0 0
        %421 = vmatprep.subr.bf16.mxu0 0
        %422 = vmatpush1.bf16.xpose.msra.mxu0 0
        %423 = vmatprep.subr.bf16.mxu0 0
        %424 = vmatpush1.bf16.xpose.msra.mxu0 0
        %425 = vmatprep.subr.bf16.mxu0 0
        %426 = vmatpush1.bf16.xpose.msra.mxu0 %v409
        %427 = vmatprep.subr.bf16.mxu0 0
        %428 = vmatpush2.bf16.xpose.msra.mxu0 0
        %429 = vmatprep.subr.bf16.mxu0 0
        %430 = vmatpush2.bf16.xpose.msra.mxu0 0
        %431 = vmatprep.subr.bf16.mxu0 0
        %432 = vmatpush2.bf16.xpose.msra.mxu0 0
        %433 = vmatprep.subr.bf16.mxu0 0
        %434 = vmatpush2.bf16.xpose.msra.mxu0 0
        %435 = vmatprep.subr.bf16.mxu0 0
        %436 = vmatpush2.bf16.xpose.msra.mxu0 0
        %437 = vmatprep.subr.bf16.mxu0 0
        %438 = vmatpush2.bf16.xpose.msra.mxu0 0
        %439 = vmatprep.subr.bf16.mxu0 0
        %440 = vmatpush2.bf16.xpose.msra.mxu0 0
        %441 = vmatprep.subr.bf16.mxu0 0
        %442 = vmatpush2.bf16.xpose.msra.mxu0 0
        %443 = vmatprep.mubr.bf16.mxu0 0
        %444 = vmatmul.mubr.bf16.gmra.mxu0 %v406
        %v445 = vpop.f32.mrf.mxu0
        %v446 = vadd.f32 0.0, %v445
        %v447 = vpop.f32.mrf.mxu0
        %v448 = vpop.f32.mrf.mxu0
        %v449 = vpop.f32.mrf.mxu0
        %450 = vdwg.mxu0
        %v451 = vsel %vm336, %v446, -inf
        %452 = vmax.xlane.f32.xlu0 %v451
        %v453 = vpop.xlane.xlu0 %452
        %v454 = vsub.f32 %v446, %v453
        %v455 = vmul.f32 %v454, 1.442695
        %v456 = vpow.pop %v455
        %v457 = vsel %vm336, %v456, 0.0
        %458 = vadd.xlane.f32.xlu0 %v457
        %v459 = vpop.xlane.xlu0 %458
        %v460 = vrcp.pop %v459
        %v461 = vmul.f32 %v456, %v460
        %s462 = scalar_lea.vmem %s2, 8
        %v463 = vld [vmem:[%s462] sm:$0xff]
        %v464 = vadd.f32 %v461, %v463
        %v465 = vpack.c.bf16 %v464, %v464
        %466 = vrot.lane.b32.xlu0 %v285, 60
        %v467 = vpop.permute.xlu0 %466
        %v469 = vsel %vm336, %v465, 0
        %v472 = vsel %vm356, %v467, 0
        %474 = vmatprep.subr.bf16.mxu0 0
        %475 = vmatpush1.bf16.msra.mxu0 0
        %476 = vmatprep.subr.bf16.mxu0 0
        %477 = vmatpush1.bf16.msra.mxu0 0
        %478 = vmatprep.subr.bf16.mxu0 0
        %479 = vmatpush1.bf16.msra.mxu0 0
        %480 = vmatprep.subr.bf16.mxu0 0
        %481 = vmatpush1.bf16.msra.mxu0 0
        %482 = vmatprep.subr.bf16.mxu0 0
        %483 = vmatpush1.bf16.msra.mxu0 0
        %484 = vmatprep.subr.bf16.mxu0 0
        %485 = vmatpush1.bf16.msra.mxu0 0
        %486 = vmatprep.subr.bf16.mxu0 0
        %487 = vmatpush1.bf16.msra.mxu0 0
        %488 = vmatprep.subr.bf16.mxu0 0
        %489 = vmatpush1.bf16.msra.mxu0 %v472
        %490 = vmatprep.subr.bf16.mxu0 0
        %491 = vmatpush2.bf16.msra.mxu0 0
        %492 = vmatprep.subr.bf16.mxu0 0
        %493 = vmatpush2.bf16.msra.mxu0 0
        %494 = vmatprep.subr.bf16.mxu0 0
        %495 = vmatpush2.bf16.msra.mxu0 0
        %496 = vmatprep.subr.bf16.mxu0 0
        %497 = vmatpush2.bf16.msra.mxu0 0
        %498 = vmatprep.subr.bf16.mxu0 0
        %499 = vmatpush2.bf16.msra.mxu0 0
        %500 = vmatprep.subr.bf16.mxu0 0
        %501 = vmatpush2.bf16.msra.mxu0 0
        %502 = vmatprep.subr.bf16.mxu0 0
        %503 = vmatpush2.bf16.msra.mxu0 0
        %504 = vmatprep.subr.bf16.mxu0 0
        %505 = vmatpush2.bf16.msra.mxu0 0
        %506 = vmatprep.mubr.bf16.mxu0 0
        %507 = vmatmul.mubr.bf16.gmra.mxu0 %v469
        %v508 = vpop.f32.mrf.mxu0
        %v509 = vadd.f32 0.0, %v508
        %v510 = vpop.f32.mrf.mxu0
        %v511 = vpop.f32.mrf.mxu0
        %v512 = vpop.f32.mrf.mxu0
        %513 = vdwg.mxu0
        %514 = vrot.lane.b32.xlu0 %v284, 120
        %v515 = vpop.permute.xlu0 %514
        %516 = vrot.lane.b32.xlu0 %v285, 88
        %v517 = vpop.permute.xlu0 %516
        %v519 = vsel %vm289, %v515, 0
        %v522 = vsel %vm289, %v517, 0
        %524 = vmatprep.subr.bf16.mxu0 0
        %525 = vmatpush1.bf16.xpose.msra.mxu0 0
        %526 = vmatprep.subr.bf16.mxu0 0
        %527 = vmatpush1.bf16.xpose.msra.mxu0 0
        %528 = vmatprep.subr.bf16.mxu0 0
        %529 = vmatpush1.bf16.xpose.msra.mxu0 0
        %530 = vmatprep.subr.bf16.mxu0 0
        %531 = vmatpush1.bf16.xpose.msra.mxu0 0
        %532 = vmatprep.subr.bf16.mxu0 0
        %533 = vmatpush1.bf16.xpose.msra.mxu0 0
        %534 = vmatprep.subr.bf16.mxu0 0
        %535 = vmatpush1.bf16.xpose.msra.mxu0 0
        %536 = vmatprep.subr.bf16.mxu0 0
        %537 = vmatpush1.bf16.xpose.msra.mxu0 0
        %538 = vmatprep.subr.bf16.mxu0 0
        %539 = vmatpush1.bf16.xpose.msra.mxu0 %v522
        %540 = vmatprep.subr.bf16.mxu0 0
        %541 = vmatpush2.bf16.xpose.msra.mxu0 0
        %542 = vmatprep.subr.bf16.mxu0 0
        %543 = vmatpush2.bf16.xpose.msra.mxu0 0
        %544 = vmatprep.subr.bf16.mxu0 0
        %545 = vmatpush2.bf16.xpose.msra.mxu0 0
        %546 = vmatprep.subr.bf16.mxu0 0
        %547 = vmatpush2.bf16.xpose.msra.mxu0 0
        %548 = vmatprep.subr.bf16.mxu0 0
        %549 = vmatpush2.bf16.xpose.msra.mxu0 0
        %550 = vmatprep.subr.bf16.mxu0 0
        %551 = vmatpush2.bf16.xpose.msra.mxu0 0
        %552 = vmatprep.subr.bf16.mxu0 0
        %553 = vmatpush2.bf16.xpose.msra.mxu0 0
        %554 = vmatprep.subr.bf16.mxu0 0
        %555 = vmatpush2.bf16.xpose.msra.mxu0 0
        %556 = vmatprep.mubr.bf16.mxu0 0
        %557 = vmatmul.mubr.bf16.gmra.mxu0 %v519
        %v558 = vpop.f32.mrf.mxu0
        %v559 = vadd.f32 0.0, %v558
        %v560 = vpop.f32.mrf.mxu0
        %v561 = vpop.f32.mrf.mxu0
        %v562 = vpop.f32.mrf.mxu0
        %563 = vdwg.mxu0
        %v564 = vsel %vm336, %v559, -inf
        %565 = vmax.xlane.f32.xlu0 %v564
        %v566 = vpop.xlane.xlu0 %565
        %v567 = vsub.f32 %v559, %v566
        %v568 = vmul.f32 %v567, 1.442695
        %v569 = vpow.pop %v568
        %v570 = vsel %vm336, %v569, 0.0
        %571 = vadd.xlane.f32.xlu0 %v570
        %v572 = vpop.xlane.xlu0 %571
        %v573 = vrcp.pop %v572
        %v574 = vmul.f32 %v569, %v573
        %s575 = scalar_lea.vmem %s2, 16
        %v576 = vld [vmem:[%s575] sm:$0xff]
        %v577 = vadd.f32 %v574, %v576
        %v578 = vpack.c.bf16 %v577, %v577
        %579 = vrot.lane.b32.xlu0 %v285, 56
        %v580 = vpop.permute.xlu0 %579
        %v582 = vsel %vm336, %v578, 0
        %v585 = vsel %vm356, %v580, 0
        %587 = vmatprep.subr.bf16.mxu0 0
        %588 = vmatpush1.bf16.msra.mxu0 0
        %589 = vmatprep.subr.bf16.mxu0 0
        %590 = vmatpush1.bf16.msra.mxu0 0
        %591 = vmatprep.subr.bf16.mxu0 0
        %592 = vmatpush1.bf16.msra.mxu0 0
        %593 = vmatprep.subr.bf16.mxu0 0
        %594 = vmatpush1.bf16.msra.mxu0 0
        %595 = vmatprep.subr.bf16.mxu0 0
        %596 = vmatpush1.bf16.msra.mxu0 0
        %597 = vmatprep.subr.bf16.mxu0 0
        %598 = vmatpush1.bf16.msra.mxu0 0
        %599 = vmatprep.subr.bf16.mxu0 0
        %600 = vmatpush1.bf16.msra.mxu0 0
        %601 = vmatprep.subr.bf16.mxu0 0
        %602 = vmatpush1.bf16.msra.mxu0 %v585
        %603 = vmatprep.subr.bf16.mxu0 0
        %604 = vmatpush2.bf16.msra.mxu0 0
        %605 = vmatprep.subr.bf16.mxu0 0
        %606 = vmatpush2.bf16.msra.mxu0 0
        %607 = vmatprep.subr.bf16.mxu0 0
        %608 = vmatpush2.bf16.msra.mxu0 0
        %609 = vmatprep.subr.bf16.mxu0 0
        %610 = vmatpush2.bf16.msra.mxu0 0
        %611 = vmatprep.subr.bf16.mxu0 0
        %612 = vmatpush2.bf16.msra.mxu0 0
        %613 = vmatprep.subr.bf16.mxu0 0
        %614 = vmatpush2.bf16.msra.mxu0 0
        %615 = vmatprep.subr.bf16.mxu0 0
        %616 = vmatpush2.bf16.msra.mxu0 0
        %617 = vmatprep.subr.bf16.mxu0 0
        %618 = vmatpush2.bf16.msra.mxu0 0
        %619 = vmatprep.mubr.bf16.mxu0 0
        %620 = vmatmul.mubr.bf16.gmra.mxu0 %v582
        %v621 = vpop.f32.mrf.mxu0
        %v622 = vadd.f32 0.0, %v621
        %v623 = vpop.f32.mrf.mxu0
        %v624 = vpop.f32.mrf.mxu0
        %v625 = vpop.f32.mrf.mxu0
        %626 = vdwg.mxu0
        %627 = vrot.lane.b32.xlu0 %v284, 116
        %v628 = vpop.permute.xlu0 %627
        %629 = vrot.lane.b32.xlu0 %v285, 84
        %v630 = vpop.permute.xlu0 %629
        %v632 = vsel %vm289, %v628, 0
        %v635 = vsel %vm289, %v630, 0
        %637 = vmatprep.subr.bf16.mxu0 0
        %638 = vmatpush1.bf16.xpose.msra.mxu0 0
        %639 = vmatprep.subr.bf16.mxu0 0
        %640 = vmatpush1.bf16.xpose.msra.mxu0 0
        %641 = vmatprep.subr.bf16.mxu0 0
        %642 = vmatpush1.bf16.xpose.msra.mxu0 0
        %643 = vmatprep.subr.bf16.mxu0 0
        %644 = vmatpush1.bf16.xpose.msra.mxu0 0
        %645 = vmatprep.subr.bf16.mxu0 0
        %646 = vmatpush1.bf16.xpose.msra.mxu0 0
        %647 = vmatprep.subr.bf16.mxu0 0
        %648 = vmatpush1.bf16.xpose.msra.mxu0 0
        %649 = vmatprep.subr.bf16.mxu0 0
        %650 = vmatpush1.bf16.xpose.msra.mxu0 0
        %651 = vmatprep.subr.bf16.mxu0 0
        %652 = vmatpush1.bf16.xpose.msra.mxu0 %v635
        %653 = vmatprep.subr.bf16.mxu0 0
        %654 = vmatpush2.bf16.xpose.msra.mxu0 0
        %655 = vmatprep.subr.bf16.mxu0 0
        %656 = vmatpush2.bf16.xpose.msra.mxu0 0
        %657 = vmatprep.subr.bf16.mxu0 0
        %658 = vmatpush2.bf16.xpose.msra.mxu0 0
        %659 = vmatprep.subr.bf16.mxu0 0
        %660 = vmatpush2.bf16.xpose.msra.mxu0 0
        %661 = vmatprep.subr.bf16.mxu0 0
        %662 = vmatpush2.bf16.xpose.msra.mxu0 0
        %663 = vmatprep.subr.bf16.mxu0 0
        %664 = vmatpush2.bf16.xpose.msra.mxu0 0
        %665 = vmatprep.subr.bf16.mxu0 0
        %666 = vmatpush2.bf16.xpose.msra.mxu0 0
        %667 = vmatprep.subr.bf16.mxu0 0
        %668 = vmatpush2.bf16.xpose.msra.mxu0 0
        %669 = vmatprep.mubr.bf16.mxu0 0
        %670 = vmatmul.mubr.bf16.gmra.mxu0 %v632
        %v671 = vpop.f32.mrf.mxu0
        %v672 = vadd.f32 0.0, %v671
        %v673 = vpop.f32.mrf.mxu0
        %v674 = vpop.f32.mrf.mxu0
        %v675 = vpop.f32.mrf.mxu0
        %676 = vdwg.mxu0
        %v677 = vsel %vm336, %v672, -inf
        %678 = vmax.xlane.f32.xlu0 %v677
        %v679 = vpop.xlane.xlu0 %678
        %v680 = vsub.f32 %v672, %v679
        %v681 = vmul.f32 %v680, 1.442695
        %v682 = vpow.pop %v681
        %v683 = vsel %vm336, %v682, 0.0
        %684 = vadd.xlane.f32.xlu0 %v683
        %v685 = vpop.xlane.xlu0 %684
        %v686 = vrcp.pop %v685
        %v687 = vmul.f32 %v682, %v686
        %s688 = scalar_lea.vmem %s2, 24
        %v689 = vld [vmem:[%s688] sm:$0xff]
        %v690 = vadd.f32 %v687, %v689
        %v691 = vpack.c.bf16 %v690, %v690
        %692 = vrot.lane.b32.xlu0 %v285, 52
        %v693 = vpop.permute.xlu0 %692
        %v695 = vsel %vm336, %v691, 0
        %v698 = vsel %vm356, %v693, 0
        %700 = vmatprep.subr.bf16.mxu0 0
        %701 = vmatpush1.bf16.msra.mxu0 0
        %702 = vmatprep.subr.bf16.mxu0 0
        %703 = vmatpush1.bf16.msra.mxu0 0
        %704 = vmatprep.subr.bf16.mxu0 0
        %705 = vmatpush1.bf16.msra.mxu0 0
        %706 = vmatprep.subr.bf16.mxu0 0
        %707 = vmatpush1.bf16.msra.mxu0 0
        %708 = vmatprep.subr.bf16.mxu0 0
        %709 = vmatpush1.bf16.msra.mxu0 0
        %710 = vmatprep.subr.bf16.mxu0 0
        %711 = vmatpush1.bf16.msra.mxu0 0
        %712 = vmatprep.subr.bf16.mxu0 0
        %713 = vmatpush1.bf16.msra.mxu0 0
        %714 = vmatprep.subr.bf16.mxu0 0
        %715 = vmatpush1.bf16.msra.mxu0 %v698
        %716 = vmatprep.subr.bf16.mxu0 0
        %717 = vmatpush2.bf16.msra.mxu0 0
        %718 = vmatprep.subr.bf16.mxu0 0
        %719 = vmatpush2.bf16.msra.mxu0 0
        %720 = vmatprep.subr.bf16.mxu0 0
        %721 = vmatpush2.bf16.msra.mxu0 0
        %722 = vmatprep.subr.bf16.mxu0 0
        %723 = vmatpush2.bf16.msra.mxu0 0
        %724 = vmatprep.subr.bf16.mxu0 0
        %725 = vmatpush2.bf16.msra.mxu0 0
        %726 = vmatprep.subr.bf16.mxu0 0
        %727 = vmatpush2.bf16.msra.mxu0 0
        %728 = vmatprep.subr.bf16.mxu0 0
        %729 = vmatpush2.bf16.msra.mxu0 0
        %730 = vmatprep.subr.bf16.mxu0 0
        %731 = vmatpush2.bf16.msra.mxu0 0
        %732 = vmatprep.mubr.bf16.mxu0 0
        %733 = vmatmul.mubr.bf16.gmra.mxu0 %v695
        %v734 = vpop.f32.mrf.mxu0
        %v735 = vadd.f32 0.0, %v734
        %v736 = vpop.f32.mrf.mxu0
        %v737 = vpop.f32.mrf.mxu0
        %v738 = vpop.f32.mrf.mxu0
        %739 = vdwg.mxu0
        %740 = vrot.lane.b32.xlu0 %v284, 112
        %v741 = vpop.permute.xlu0 %740
        %742 = vrot.lane.b32.xlu0 %v285, 80
        %v743 = vpop.permute.xlu0 %742
        %v745 = vsel %vm289, %v741, 0
        %v748 = vsel %vm289, %v743, 0
        %750 = vmatprep.subr.bf16.mxu0 0
        %751 = vmatpush1.bf16.xpose.msra.mxu0 0
        %752 = vmatprep.subr.bf16.mxu0 0
        %753 = vmatpush1.bf16.xpose.msra.mxu0 0
        %754 = vmatprep.subr.bf16.mxu0 0
        %755 = vmatpush1.bf16.xpose.msra.mxu0 0
        %756 = vmatprep.subr.bf16.mxu0 0
        %757 = vmatpush1.bf16.xpose.msra.mxu0 0
        %758 = vmatprep.subr.bf16.mxu0 0
        %759 = vmatpush1.bf16.xpose.msra.mxu0 0
        %760 = vmatprep.subr.bf16.mxu0 0
        %761 = vmatpush1.bf16.xpose.msra.mxu0 0
        %762 = vmatprep.subr.bf16.mxu0 0
        %763 = vmatpush1.bf16.xpose.msra.mxu0 0
        %764 = vmatprep.subr.bf16.mxu0 0
        %765 = vmatpush1.bf16.xpose.msra.mxu0 %v748
        %766 = vmatprep.subr.bf16.mxu0 0
        %767 = vmatpush2.bf16.xpose.msra.mxu0 0
        %768 = vmatprep.subr.bf16.mxu0 0
        %769 = vmatpush2.bf16.xpose.msra.mxu0 0
        %770 = vmatprep.subr.bf16.mxu0 0
        %771 = vmatpush2.bf16.xpose.msra.mxu0 0
        %772 = vmatprep.subr.bf16.mxu0 0
        %773 = vmatpush2.bf16.xpose.msra.mxu0 0
        %774 = vmatprep.subr.bf16.mxu0 0
        %775 = vmatpush2.bf16.xpose.msra.mxu0 0
        %776 = vmatprep.subr.bf16.mxu0 0
        %777 = vmatpush2.bf16.xpose.msra.mxu0 0
        %778 = vmatprep.subr.bf16.mxu0 0
        %779 = vmatpush2.bf16.xpose.msra.mxu0 0
        %780 = vmatprep.subr.bf16.mxu0 0
        %781 = vmatpush2.bf16.xpose.msra.mxu0 0
        %782 = vmatprep.mubr.bf16.mxu0 0
        %783 = vmatmul.mubr.bf16.gmra.mxu0 %v745
        %v784 = vpop.f32.mrf.mxu0
        %v785 = vadd.f32 0.0, %v784
        %v786 = vpop.f32.mrf.mxu0
        %v787 = vpop.f32.mrf.mxu0
        %v788 = vpop.f32.mrf.mxu0
        %789 = vdwg.mxu0
        %v790 = vsel %vm336, %v785, -inf
        %791 = vmax.xlane.f32.xlu0 %v790
        %v792 = vpop.xlane.xlu0 %791
        %v793 = vsub.f32 %v785, %v792
        %v794 = vmul.f32 %v793, 1.442695
        %v795 = vpow.pop %v794
        %v796 = vsel %vm336, %v795, 0.0
        %797 = vadd.xlane.f32.xlu0 %v796
        %v798 = vpop.xlane.xlu0 %797
        %v799 = vrcp.pop %v798
        %v800 = vmul.f32 %v795, %v799
        %s801 = scalar_lea.vmem %s2, 32
        %v802 = vld [vmem:[%s801] sm:$0xff]
        %v803 = vadd.f32 %v800, %v802
        %v804 = vpack.c.bf16 %v803, %v803
        %805 = vrot.lane.b32.xlu0 %v285, 48
        %v806 = vpop.permute.xlu0 %805
        %v808 = vsel %vm336, %v804, 0
        %v811 = vsel %vm356, %v806, 0
        %813 = vmatprep.subr.bf16.mxu0 0
        %814 = vmatpush1.bf16.msra.mxu0 0
        %815 = vmatprep.subr.bf16.mxu0 0
        %816 = vmatpush1.bf16.msra.mxu0 0
        %817 = vmatprep.subr.bf16.mxu0 0
        %818 = vmatpush1.bf16.msra.mxu0 0
        %819 = vmatprep.subr.bf16.mxu0 0
        %820 = vmatpush1.bf16.msra.mxu0 0
        %821 = vmatprep.subr.bf16.mxu0 0
        %822 = vmatpush1.bf16.msra.mxu0 0
        %823 = vmatprep.subr.bf16.mxu0 0
        %824 = vmatpush1.bf16.msra.mxu0 0
        %825 = vmatprep.subr.bf16.mxu0 0
        %826 = vmatpush1.bf16.msra.mxu0 0
        %827 = vmatprep.subr.bf16.mxu0 0
        %828 = vmatpush1.bf16.msra.mxu0 %v811
        %829 = vmatprep.subr.bf16.mxu0 0
        %830 = vmatpush2.bf16.msra.mxu0 0
        %831 = vmatprep.subr.bf16.mxu0 0
        %832 = vmatpush2.bf16.msra.mxu0 0
        %833 = vmatprep.subr.bf16.mxu0 0
        %834 = vmatpush2.bf16.msra.mxu0 0
        %835 = vmatprep.subr.bf16.mxu0 0
        %836 = vmatpush2.bf16.msra.mxu0 0
        %837 = vmatprep.subr.bf16.mxu0 0
        %838 = vmatpush2.bf16.msra.mxu0 0
        %839 = vmatprep.subr.bf16.mxu0 0
        %840 = vmatpush2.bf16.msra.mxu0 0
        %841 = vmatprep.subr.bf16.mxu0 0
        %842 = vmatpush2.bf16.msra.mxu0 0
        %843 = vmatprep.subr.bf16.mxu0 0
        %844 = vmatpush2.bf16.msra.mxu0 0
        %845 = vmatprep.mubr.bf16.mxu0 0
        %846 = vmatmul.mubr.bf16.gmra.mxu0 %v808
        %v847 = vpop.f32.mrf.mxu0
        %v848 = vadd.f32 0.0, %v847
        %v849 = vpop.f32.mrf.mxu0
        %v850 = vpop.f32.mrf.mxu0
        %v851 = vpop.f32.mrf.mxu0
        %852 = vdwg.mxu0
        %853 = vrot.lane.b32.xlu0 %v284, 108
        %v854 = vpop.permute.xlu0 %853
        %855 = vrot.lane.b32.xlu0 %v285, 76
        %v856 = vpop.permute.xlu0 %855
        %v858 = vsel %vm289, %v854, 0
        %v861 = vsel %vm289, %v856, 0
        %863 = vmatprep.subr.bf16.mxu0 0
        %864 = vmatpush1.bf16.xpose.msra.mxu0 0
        %865 = vmatprep.subr.bf16.mxu0 0
        %866 = vmatpush1.bf16.xpose.msra.mxu0 0
        %867 = vmatprep.subr.bf16.mxu0 0
        %868 = vmatpush1.bf16.xpose.msra.mxu0 0
        %869 = vmatprep.subr.bf16.mxu0 0
        %870 = vmatpush1.bf16.xpose.msra.mxu0 0
        %871 = vmatprep.subr.bf16.mxu0 0
        %872 = vmatpush1.bf16.xpose.msra.mxu0 0
        %873 = vmatprep.subr.bf16.mxu0 0
        %874 = vmatpush1.bf16.xpose.msra.mxu0 0
        %875 = vmatprep.subr.bf16.mxu0 0
        %876 = vmatpush1.bf16.xpose.msra.mxu0 0
        %877 = vmatprep.subr.bf16.mxu0 0
        %878 = vmatpush1.bf16.xpose.msra.mxu0 %v861
        %879 = vmatprep.subr.bf16.mxu0 0
        %880 = vmatpush2.bf16.xpose.msra.mxu0 0
        %881 = vmatprep.subr.bf16.mxu0 0
        %882 = vmatpush2.bf16.xpose.msra.mxu0 0
        %883 = vmatprep.subr.bf16.mxu0 0
        %884 = vmatpush2.bf16.xpose.msra.mxu0 0
        %885 = vmatprep.subr.bf16.mxu0 0
        %886 = vmatpush2.bf16.xpose.msra.mxu0 0
        %887 = vmatprep.subr.bf16.mxu0 0
        %888 = vmatpush2.bf16.xpose.msra.mxu0 0
        %889 = vmatprep.subr.bf16.mxu0 0
        %890 = vmatpush2.bf16.xpose.msra.mxu0 0
        %891 = vmatprep.subr.bf16.mxu0 0
        %892 = vmatpush2.bf16.xpose.msra.mxu0 0
        %893 = vmatprep.subr.bf16.mxu0 0
        %894 = vmatpush2.bf16.xpose.msra.mxu0 0
        %895 = vmatprep.mubr.bf16.mxu0 0
        %896 = vmatmul.mubr.bf16.gmra.mxu0 %v858
        %v897 = vpop.f32.mrf.mxu0
        %v898 = vadd.f32 0.0, %v897
        %v899 = vpop.f32.mrf.mxu0
        %v900 = vpop.f32.mrf.mxu0
        %v901 = vpop.f32.mrf.mxu0
        %902 = vdwg.mxu0
        %v903 = vsel %vm336, %v898, -inf
        %904 = vmax.xlane.f32.xlu0 %v903
        %v905 = vpop.xlane.xlu0 %904
        %v906 = vsub.f32 %v898, %v905
        %v907 = vmul.f32 %v906, 1.442695
        %v908 = vpow.pop %v907
        %v909 = vsel %vm336, %v908, 0.0
        %910 = vadd.xlane.f32.xlu0 %v909
        %v911 = vpop.xlane.xlu0 %910
        %v912 = vrcp.pop %v911
        %v913 = vmul.f32 %v908, %v912
        %s914 = scalar_lea.vmem %s2, 40
        %v915 = vld [vmem:[%s914] sm:$0xff]
        %v916 = vadd.f32 %v913, %v915
        %v917 = vpack.c.bf16 %v916, %v916
        %918 = vrot.lane.b32.xlu0 %v285, 44
        %v919 = vpop.permute.xlu0 %918
        %v921 = vsel %vm336, %v917, 0
        %v924 = vsel %vm356, %v919, 0
        %926 = vmatprep.subr.bf16.mxu0 0
        %927 = vmatpush1.bf16.msra.mxu0 0
        %928 = vmatprep.subr.bf16.mxu0 0
        %929 = vmatpush1.bf16.msra.mxu0 0
        %930 = vmatprep.subr.bf16.mxu0 0
        %931 = vmatpush1.bf16.msra.mxu0 0
        %932 = vmatprep.subr.bf16.mxu0 0
        %933 = vmatpush1.bf16.msra.mxu0 0
        %934 = vmatprep.subr.bf16.mxu0 0
        %935 = vmatpush1.bf16.msra.mxu0 0
        %936 = vmatprep.subr.bf16.mxu0 0
        %937 = vmatpush1.bf16.msra.mxu0 0
        %938 = vmatprep.subr.bf16.mxu0 0
        %939 = vmatpush1.bf16.msra.mxu0 0
        %940 = vmatprep.subr.bf16.mxu0 0
        %941 = vmatpush1.bf16.msra.mxu0 %v924
        %942 = vmatprep.subr.bf16.mxu0 0
        %943 = vmatpush2.bf16.msra.mxu0 0
        %944 = vmatprep.subr.bf16.mxu0 0
        %945 = vmatpush2.bf16.msra.mxu0 0
        %946 = vmatprep.subr.bf16.mxu0 0
        %947 = vmatpush2.bf16.msra.mxu0 0
        %948 = vmatprep.subr.bf16.mxu0 0
        %949 = vmatpush2.bf16.msra.mxu0 0
        %950 = vmatprep.subr.bf16.mxu0 0
        %951 = vmatpush2.bf16.msra.mxu0 0
        %952 = vmatprep.subr.bf16.mxu0 0
        %953 = vmatpush2.bf16.msra.mxu0 0
        %954 = vmatprep.subr.bf16.mxu0 0
        %955 = vmatpush2.bf16.msra.mxu0 0
        %956 = vmatprep.subr.bf16.mxu0 0
        %957 = vmatpush2.bf16.msra.mxu0 0
        %958 = vmatprep.mubr.bf16.mxu0 0
        %959 = vmatmul.mubr.bf16.gmra.mxu0 %v921
        %v960 = vpop.f32.mrf.mxu0
        %v961 = vadd.f32 0.0, %v960
        %v962 = vpop.f32.mrf.mxu0
        %v963 = vpop.f32.mrf.mxu0
        %v964 = vpop.f32.mrf.mxu0
        %965 = vdwg.mxu0
        %966 = vrot.lane.b32.xlu0 %v284, 104
        %v967 = vpop.permute.xlu0 %966
        %968 = vrot.lane.b32.xlu0 %v285, 72
        %v969 = vpop.permute.xlu0 %968
        %v971 = vsel %vm289, %v967, 0
        %v974 = vsel %vm289, %v969, 0
        %976 = vmatprep.subr.bf16.mxu0 0
        %977 = vmatpush1.bf16.xpose.msra.mxu0 0
        %978 = vmatprep.subr.bf16.mxu0 0
        %979 = vmatpush1.bf16.xpose.msra.mxu0 0
        %980 = vmatprep.subr.bf16.mxu0 0
        %981 = vmatpush1.bf16.xpose.msra.mxu0 0
        %982 = vmatprep.subr.bf16.mxu0 0
        %983 = vmatpush1.bf16.xpose.msra.mxu0 0
        %984 = vmatprep.subr.bf16.mxu0 0
        %985 = vmatpush1.bf16.xpose.msra.mxu0 0
        %986 = vmatprep.subr.bf16.mxu0 0
        %987 = vmatpush1.bf16.xpose.msra.mxu0 0
        %988 = vmatprep.subr.bf16.mxu0 0
        %989 = vmatpush1.bf16.xpose.msra.mxu0 0
        %990 = vmatprep.subr.bf16.mxu0 0
        %991 = vmatpush1.bf16.xpose.msra.mxu0 %v974
        %992 = vmatprep.subr.bf16.mxu0 0
        %993 = vmatpush2.bf16.xpose.msra.mxu0 0
        %994 = vmatprep.subr.bf16.mxu0 0
        %995 = vmatpush2.bf16.xpose.msra.mxu0 0
        %996 = vmatprep.subr.bf16.mxu0 0
        %997 = vmatpush2.bf16.xpose.msra.mxu0 0
        %998 = vmatprep.subr.bf16.mxu0 0
        %999 = vmatpush2.bf16.xpose.msra.mxu0 0
        %1000 = vmatprep.subr.bf16.mxu0 0
        %1001 = vmatpush2.bf16.xpose.msra.mxu0 0
        %1002 = vmatprep.subr.bf16.mxu0 0
        %1003 = vmatpush2.bf16.xpose.msra.mxu0 0
        %1004 = vmatprep.subr.bf16.mxu0 0
        %1005 = vmatpush2.bf16.xpose.msra.mxu0 0
        %1006 = vmatprep.subr.bf16.mxu0 0
        %1007 = vmatpush2.bf16.xpose.msra.mxu0 0
        %1008 = vmatprep.mubr.bf16.mxu0 0
        %1009 = vmatmul.mubr.bf16.gmra.mxu0 %v971
        %v1010 = vpop.f32.mrf.mxu0
        %v1011 = vadd.f32 0.0, %v1010
        %v1012 = vpop.f32.mrf.mxu0
        %v1013 = vpop.f32.mrf.mxu0
        %v1014 = vpop.f32.mrf.mxu0
        %1015 = vdwg.mxu0
        %v1016 = vsel %vm336, %v1011, -inf
        %1017 = vmax.xlane.f32.xlu0 %v1016
        %v1018 = vpop.xlane.xlu0 %1017
        %v1019 = vsub.f32 %v1011, %v1018
        %v1020 = vmul.f32 %v1019, 1.442695
        %v1021 = vpow.pop %v1020
        %v1022 = vsel %vm336, %v1021, 0.0
        %1023 = vadd.xlane.f32.xlu0 %v1022
        %v1024 = vpop.xlane.xlu0 %1023
        %v1025 = vrcp.pop %v1024
        %v1026 = vmul.f32 %v1021, %v1025
        %s1027 = scalar_lea.vmem %s2, 48
        %v1028 = vld [vmem:[%s1027] sm:$0xff]
        %v1029 = vadd.f32 %v1026, %v1028
        %v1030 = vpack.c.bf16 %v1029, %v1029
        %1031 = vrot.lane.b32.xlu0 %v285, 40
        %v1032 = vpop.permute.xlu0 %1031
        %v1034 = vsel %vm336, %v1030, 0
        %v1037 = vsel %vm356, %v1032, 0
        %1039 = vmatprep.subr.bf16.mxu0 0
        %1040 = vmatpush1.bf16.msra.mxu0 0
        %1041 = vmatprep.subr.bf16.mxu0 0
        %1042 = vmatpush1.bf16.msra.mxu0 0
        %1043 = vmatprep.subr.bf16.mxu0 0
        %1044 = vmatpush1.bf16.msra.mxu0 0
        %1045 = vmatprep.subr.bf16.mxu0 0
        %1046 = vmatpush1.bf16.msra.mxu0 0
        %1047 = vmatprep.subr.bf16.mxu0 0
        %1048 = vmatpush1.bf16.msra.mxu0 0
        %1049 = vmatprep.subr.bf16.mxu0 0
        %1050 = vmatpush1.bf16.msra.mxu0 0
        %1051 = vmatprep.subr.bf16.mxu0 0
        %1052 = vmatpush1.bf16.msra.mxu0 0
        %1053 = vmatprep.subr.bf16.mxu0 0
        %1054 = vmatpush1.bf16.msra.mxu0 %v1037
        %1055 = vmatprep.subr.bf16.mxu0 0
        %1056 = vmatpush2.bf16.msra.mxu0 0
        %1057 = vmatprep.subr.bf16.mxu0 0
        %1058 = vmatpush2.bf16.msra.mxu0 0
        %1059 = vmatprep.subr.bf16.mxu0 0
        %1060 = vmatpush2.bf16.msra.mxu0 0
        %1061 = vmatprep.subr.bf16.mxu0 0
        %1062 = vmatpush2.bf16.msra.mxu0 0
        %1063 = vmatprep.subr.bf16.mxu0 0
        %1064 = vmatpush2.bf16.msra.mxu0 0
        %1065 = vmatprep.subr.bf16.mxu0 0
        %1066 = vmatpush2.bf16.msra.mxu0 0
        %1067 = vmatprep.subr.bf16.mxu0 0
        %1068 = vmatpush2.bf16.msra.mxu0 0
        %1069 = vmatprep.subr.bf16.mxu0 0
        %1070 = vmatpush2.bf16.msra.mxu0 0
        %1071 = vmatprep.mubr.bf16.mxu0 0
        %1072 = vmatmul.mubr.bf16.gmra.mxu0 %v1034
        %v1073 = vpop.f32.mrf.mxu0
        %v1074 = vadd.f32 0.0, %v1073
        %v1075 = vpop.f32.mrf.mxu0
        %v1076 = vpop.f32.mrf.mxu0
        %v1077 = vpop.f32.mrf.mxu0
        %1078 = vdwg.mxu0
        %1079 = vrot.lane.b32.xlu0 %v284, 100
        %v1080 = vpop.permute.xlu0 %1079
        %1081 = vrot.lane.b32.xlu0 %v285, 68
        %v1082 = vpop.permute.xlu0 %1081
        %v1084 = vsel %vm289, %v1080, 0
        %v1087 = vsel %vm289, %v1082, 0
        %1089 = vmatprep.subr.bf16.mxu0 0
        %1090 = vmatpush1.bf16.xpose.msra.mxu0 0
        %1091 = vmatprep.subr.bf16.mxu0 0
        %1092 = vmatpush1.bf16.xpose.msra.mxu0 0
        %1093 = vmatprep.subr.bf16.mxu0 0
        %1094 = vmatpush1.bf16.xpose.msra.mxu0 0
        %1095 = vmatprep.subr.bf16.mxu0 0
        %1096 = vmatpush1.bf16.xpose.msra.mxu0 0
        %1097 = vmatprep.subr.bf16.mxu0 0
        %1098 = vmatpush1.bf16.xpose.msra.mxu0 0
        %1099 = vmatprep.subr.bf16.mxu0 0
        %1100 = vmatpush1.bf16.xpose.msra.mxu0 0
        %1101 = vmatprep.subr.bf16.mxu0 0
        %1102 = vmatpush1.bf16.xpose.msra.mxu0 0
        %1103 = vmatprep.subr.bf16.mxu0 0
        %1104 = vmatpush1.bf16.xpose.msra.mxu0 %v1087
        %1105 = vmatprep.subr.bf16.mxu0 0
        %1106 = vmatpush2.bf16.xpose.msra.mxu0 0
        %1107 = vmatprep.subr.bf16.mxu0 0
        %1108 = vmatpush2.bf16.xpose.msra.mxu0 0
        %1109 = vmatprep.subr.bf16.mxu0 0
        %1110 = vmatpush2.bf16.xpose.msra.mxu0 0
        %1111 = vmatprep.subr.bf16.mxu0 0
        %1112 = vmatpush2.bf16.xpose.msra.mxu0 0
        %1113 = vmatprep.subr.bf16.mxu0 0
        %1114 = vmatpush2.bf16.xpose.msra.mxu0 0
        %1115 = vmatprep.subr.bf16.mxu0 0
        %1116 = vmatpush2.bf16.xpose.msra.mxu0 0
        %1117 = vmatprep.subr.bf16.mxu0 0
        %1118 = vmatpush2.bf16.xpose.msra.mxu0 0
        %1119 = vmatprep.subr.bf16.mxu0 0
        %1120 = vmatpush2.bf16.xpose.msra.mxu0 0
        %1121 = vmatprep.mubr.bf16.mxu0 0
        %1122 = vmatmul.mubr.bf16.gmra.mxu0 %v1084
        %v1123 = vpop.f32.mrf.mxu0
        %v1124 = vadd.f32 0.0, %v1123
        %v1125 = vpop.f32.mrf.mxu0
        %v1126 = vpop.f32.mrf.mxu0
        %v1127 = vpop.f32.mrf.mxu0
        %1128 = vdwg.mxu0
        %v1129 = vsel %vm336, %v1124, -inf
        %1130 = vmax.xlane.f32.xlu0 %v1129
        %v1131 = vpop.xlane.xlu0 %1130
        %v1132 = vsub.f32 %v1124, %v1131
        %v1133 = vmul.f32 %v1132, 1.442695
        %v1134 = vpow.pop %v1133
        %v1135 = vsel %vm336, %v1134, 0.0
        %1136 = vadd.xlane.f32.xlu0 %v1135
        %v1137 = vpop.xlane.xlu0 %1136
        %v1138 = vrcp.pop %v1137
        %v1139 = vmul.f32 %v1134, %v1138
        %s1140 = scalar_lea.vmem %s2, 56
        %v1141 = vld [vmem:[%s1140] sm:$0xff]
        %v1142 = vadd.f32 %v1139, %v1141
        %v1143 = vpack.c.bf16 %v1142, %v1142
        %1144 = vrot.lane.b32.xlu0 %v285, 36
        %v1145 = vpop.permute.xlu0 %1144
        %v1147 = vsel %vm336, %v1143, 0
        %v1150 = vsel %vm356, %v1145, 0
        %1152 = vmatprep.subr.bf16.mxu0 0
        %1153 = vmatpush1.bf16.msra.mxu0 0
        %1154 = vmatprep.subr.bf16.mxu0 0
        %1155 = vmatpush1.bf16.msra.mxu0 0
        %1156 = vmatprep.subr.bf16.mxu0 0
        %1157 = vmatpush1.bf16.msra.mxu0 0
        %1158 = vmatprep.subr.bf16.mxu0 0
        %1159 = vmatpush1.bf16.msra.mxu0 0
        %1160 = vmatprep.subr.bf16.mxu0 0
        %1161 = vmatpush1.bf16.msra.mxu0 0
        %1162 = vmatprep.subr.bf16.mxu0 0
        %1163 = vmatpush1.bf16.msra.mxu0 0
        %1164 = vmatprep.subr.bf16.mxu0 0
        %1165 = vmatpush1.bf16.msra.mxu0 0
        %1166 = vmatprep.subr.bf16.mxu0 0
        %1167 = vmatpush1.bf16.msra.mxu0 %v1150
        %1168 = vmatprep.subr.bf16.mxu0 0
        %1169 = vmatpush2.bf16.msra.mxu0 0
        %1170 = vmatprep.subr.bf16.mxu0 0
        %1171 = vmatpush2.bf16.msra.mxu0 0
        %1172 = vmatprep.subr.bf16.mxu0 0
        %1173 = vmatpush2.bf16.msra.mxu0 0
        %1174 = vmatprep.subr.bf16.mxu0 0
        %1175 = vmatpush2.bf16.msra.mxu0 0
        %1176 = vmatprep.subr.bf16.mxu0 0
        %1177 = vmatpush2.bf16.msra.mxu0 0
        %1178 = vmatprep.subr.bf16.mxu0 0
        %1179 = vmatpush2.bf16.msra.mxu0 0
        %1180 = vmatprep.subr.bf16.mxu0 0
        %1181 = vmatpush2.bf16.msra.mxu0 0
        %1182 = vmatprep.subr.bf16.mxu0 0
        %1183 = vmatpush2.bf16.msra.mxu0 0
        %1184 = vmatprep.mubr.bf16.mxu0 0
        %1185 = vmatmul.mubr.bf16.gmra.mxu0 %v1147
        %v1186 = vpop.f32.mrf.mxu0
        %v1187 = vadd.f32 0.0, %v1186
        %v1188 = vpop.f32.mrf.mxu0
        %v1189 = vpop.f32.mrf.mxu0
        %v1190 = vpop.f32.mrf.mxu0
        %1191 = vdwg.mxu0
        %1193 = vrot.lane.b32.xlu0 %v509, 4
        %v1194 = vpop.permute.xlu0 %1193
        %1197 = vrot.lane.b32.xlu0 %v622, 8
        %v1198 = vpop.permute.xlu0 %1197
        %1201 = vrot.lane.b32.xlu0 %v735, 12
        %v1202 = vpop.permute.xlu0 %1201
        %1205 = vrot.lane.b32.xlu0 %v848, 16
        %v1206 = vpop.permute.xlu0 %1205
        %1209 = vrot.lane.b32.xlu0 %v961, 20
        %v1210 = vpop.permute.xlu0 %1209
        %1213 = vrot.lane.b32.xlu0 %v1074, 24
        %v1214 = vpop.permute.xlu0 %1213
        %1217 = vrot.lane.b32.xlu0 %v1187, 28
        %v1218 = vpop.permute.xlu0 %1217
        %v1220 = vsel %vm289, %v395, %v1194
        %v1221 = vsel %vm336, %v1220, %v1198
        %vm1222 = vcmask 97280
        %v1223 = vsel %vm1222, %v1221, %v1202
        %vm1224 = vcmask 130048
        %v1225 = vsel %vm1224, %v1223, %v1206
        %vm1226 = vcmask 162816
        %v1227 = vsel %vm1226, %v1225, %v1210
        %vm1228 = vcmask 195584
        %v1229 = vsel %vm1228, %v1227, %v1214
        %vm1230 = vcmask 228352
        %v1231 = vsel %vm1230, %v1229, %v1218
        %v1232 = vsel %vm239, %v1231, 0.0
        %1233 = vadd.xlane.f32.xlu0 %v1232
        %v1234 = vpop.xlane.xlu0 %1233
        %v1235 = vrcp.pop 32.0
        %v1236 = vmul.f32 %v1234, %v1235
        %v1237 = vmul.f32 %v1231, %v1231
        %v1238 = vsel %vm239, %v1237, 0.0
        %1239 = vadd.xlane.f32.xlu0 %v1238
        %v1240 = vpop.xlane.xlu0 %1239
        %v1241 = vmul.f32 %v1240, %v1235
        %v1242 = vmul.f32 %v1236, %v1236
        %v1243 = vsub.f32 %v1241, %v1242
        %v1244 = vadd.f32 %v1243, 1e-05
        %v1245 = vrsqrt.pop %v1244
        %v1246 = vsub.f32 %v1231, %v1236
        %v1247 = vmul.f32 %v1246, %v1245
        %v1248 = vld [vmem:[%s3] sm:$0x1]
        %v1250 = vlaneseq
        %v1251 = vshrl.u32 %v1250, 7
        %v1252 = vsub.s32 0, %v1251
        %v1253 = vrot.slane %v1248, %v1252
        %v1255 = vmul.f32 %v1247, %v1253
        %v1256 = vld [vmem:[%s4] sm:$0x1]
        %v1258 = vlaneseq
        %v1259 = vshrl.u32 %v1258, 7
        %v1260 = vsub.s32 0, %v1259
        %v1261 = vrot.slane %v1256, %v1260
        %v1263 = vadd.f32 %v1255, %v1261
        %1264 = vst.msk [vmem:[%s215] sm:$0xff] %vm239, %v1263
        %s1265 = sand.u32 %s137, 1
        %s1266 = scalar_lea.sflag [#allocation3], %s1265
        %s1267 = sand.u32 %s137, 1
        %s1268 = smul.addr %s1267, 8
        %s1269 = scalar_lea.vmem [#allocation2], %s1268
        // Predicated region
        $region41: #{attention_rel_scl.1} parent=39 // pred_check
          %p1270 = pneg %p147
        $region42: #{attention_rel_scl.1} parent=39 // pred_check_branch
          %1272 = sbr.rel (%p1270) target = $region44
        $region43: #{attention_rel_scl.1} parent=39 // pred_region
          %s1274 = ssub.s32 128, 128
          %1275 = vsyncadd %s1266, %s1274
          %s1276 = smul.addr %s19, 128
          %s1277 = scalar_lea.hbm %s5, %s1276
          %s1279 = sshll.u32 %s1269, 4
          %s1280 = int_to_ptr.vmem [resolvable:$true] %s1279
          %1282 = dma.vmem_to_hbm [thread:$0]  %s1280, 128, %s1277, %s1266
        $region44: #{attention_rel_scl.1} parent=39 // pred_fallthru
          _
      $region40: #{attention_rel_scl.1} parent=5 // pred_fallthru
        _
      %p1283 = scmp.le.s32.totalorder 2, %s14
      // Predicated region
      $region45: #{attention_rel_scl.1} parent=5 // pred_check
        %p1284 = pneg %p1283
      $region46: #{attention_rel_scl.1} parent=5 // pred_check_branch
        %1286 = sbr.rel (%p1284) target = $region48
      $region47: #{attention_rel_scl.1} parent=5 // pred_region
        %s1287 = ssub.s32 %s14, 2
        // Predicated region
        $region49: #{attention_rel_scl.1} parent=47 // pred_check
          %p1288 = pneg %p153
        $region50: #{attention_rel_scl.1} parent=47 // pred_check_branch
          %1290 = sbr.rel (%p1288) target = $region52
        $region51: #{attention_rel_scl.1} parent=47 // pred_region
          %s1291 = sand.u32 %s138, 1
          %s1292 = scalar_lea.sflag [#allocation3], %s1291
          %s1293 = sand.u32 %s138, 1
          %s1294 = smul.addr %s1293, 8
          %s1295 = scalar_lea.vmem [#allocation2], %s1294
          %1296 = dma.done %s1292, 128
        $region52: #{attention_rel_scl.1} parent=47 // pred_fallthru
          _
      $region48: #{attention_rel_scl.1} parent=5 // pred_fallthru
        _
    $region6: #{attention_rel_scl.1} parent=1 // loop_footer
      %s18 = sadd.s32 1, %s14
    $region7: #{attention_rel_scl.1} parent=1 // loop_footer_branch
      %13 = sbr.rel target = $region3
    $region8: #{attention_rel_scl.1} parent=1 // loop_exit
      _
    %1297 = vsyncpa [#allocation3], 1
    %s1298 = scalar_lea.sflag [#allocation3], 1
    %1299 = vsyncpa %s1298, 1

</llo_original>
